<compile_context>
chip_gen: v5e
topology: v5e:2x2
jax: 0.10.0
libtpu: 0.0.40
codegen_flags: <defaults>
</compile_context>

<pallas_src>
import jax
import jax.numpy as jnp
from jax.experimental import pallas as pl
from jax.experimental.pallas import tpu as pltpu


# ------------------------------ fused kernel -------------------------------

def _lenet_fused_kernel(
    xcat_ref,        # (28B, 160) bf16  conv1 tap-fused input, rows=(y,b)
    k1_ref,          # (160, 168) bf16  conv1 banded weights (taps stacked on K)
    ph1_ref,         # (14B, 28B) bf16  pool1 row-averaging matrix
    pw1_ref,         # (168, 128) bf16  pool1 col-averaging matrix (lane-padded)
    k2_ref,          # (640, 160) bf16  conv2 banded weights (taps stacked on K)
    ph2_ref,         # (5B, 10B)  bf16  pool2 row-averaging matrix
    pw2_ref,         # (160, 128) bf16  pool2 col-averaging matrix (lane-padded)
    w1_ref,          # (640, 120) bf16  fc1 weights (y-blocks stacked on K)
    w2_ref,          # (120, 84)  bf16  fc2 weights
    w3_ref,          # (84, 10)   bf16  fc3 weights
    bias_ref,        # (5, 168)   f32   packed biases (conv1,conv2,fc1,fc2,fc3)
    out_ref,         # (B, 10)    f32   softmax probabilities
):
    f32, bf16 = jnp.float32, jnp.bfloat16
    B = out_ref.shape[0]
    KH = 5

    biases = bias_ref[...]                                     # (5, 168) f32

    def sigmoid(v):
        # single EUP transcendental; exactly equal to 1/(1+exp(-v))
        return 0.5 * jnp.tanh(0.5 * v) + 0.5

    # ---- conv1 (5x5, pad=2, 1->6) + sigmoid: one fused-K matmul -------------
    acc1 = jnp.dot(xcat_ref[...], k1_ref[...], preferred_element_type=f32)
    a1 = sigmoid(acc1 + biases[0:1, :])                        # (28B, 168) f32

    # ---- pool1: 2x2/2 average = PH1 @ a1 @ PW1 ------------------------------
    r1 = jnp.dot(ph1_ref[...], a1.astype(bf16), preferred_element_type=f32)
    p1 = jnp.dot(r1.astype(bf16), pw1_ref[...], preferred_element_type=f32)
    # p1: (14B, 128), rows=(y,b), lanes=(x*6+c, zero-padded to 128)

    # ---- conv2 (5x5, pad=0, 6->16) + sigmoid: tap-fused single matmul -------
    HO2 = 10
    p1cat = jnp.concatenate(
        [p1[i * B:(i + HO2) * B, :] for i in range(KH)], axis=1)   # (10B, 640)
    acc2 = jnp.dot(p1cat.astype(bf16), k2_ref[...], preferred_element_type=f32)
    a2 = sigmoid(acc2 + biases[1:2, 0:160])                    # (10B, 160) f32

    # ---- pool2 --------------------------------------------------------------
    r2 = jnp.dot(ph2_ref[...], a2.astype(bf16), preferred_element_type=f32)
    p2 = jnp.dot(r2.astype(bf16), pw2_ref[...], preferred_element_type=f32)
    # p2: (5B, 128), rows=(y,b), lanes=(x*16+f, zero-padded to 128)

    # ---- fc1 + sigmoid: y-fused single matmul -------------------------------
    p2cat = jnp.concatenate(
        [p2[y * B:(y + 1) * B, :] for y in range(5)], axis=1)      # (B, 640)
    h = jnp.dot(p2cat.astype(bf16), w1_ref[...], preferred_element_type=f32)
    h = sigmoid(h + biases[2:3, 0:120])                        # (B, 120)

    # ---- fc2 + sigmoid ------------------------------------------------------
    h = jnp.dot(h.astype(bf16), w2_ref[...], preferred_element_type=f32)
    h = sigmoid(h + biases[3:4, 0:84])                         # (B, 84)

    # ---- fc3 + softmax (exact) ----------------------------------------------
    logits = jnp.dot(h.astype(bf16), w3_ref[...], preferred_element_type=f32)
    logits = logits + biases[4:5, 0:10]                        # (B, 10)
    logits = logits - jnp.max(logits, axis=-1, keepdims=True)
    e = jnp.exp(logits)
    out_ref[...] = e / jnp.sum(e, axis=-1, keepdims=True)


# ------------------------- host-side weight repack --------------------------

def _conv_band_mats(w, Wp, Wo):
    """w: (Cout, Cin, kh, kw) -> (kh, Wp*Cin, Wo*Cout) banded matrices K_i with
    K_i[wp*Cin + c, x*Cout + f] = w[f, c, i, wp - x] when 0 <= wp-x < kw."""
    Cout, Cin, kh, kw = w.shape
    wp = jnp.arange(Wp)[:, None]
    xx = jnp.arange(Wo)[None, :]
    j = wp - xx
    valid = (j >= 0) & (j < kw)
    jc = jnp.clip(j, 0, kw - 1)
    mats = []
    for i in range(kh):
        wi = w[:, :, i, :][:, :, jc]                           # (Cout, Cin, Wp, Wo)
        wi = jnp.where(valid[None, None, :, :], wi, 0.0)
        mats.append(wi.transpose(2, 1, 3, 0).reshape(Wp * Cin, Wo * Cout))
    return jnp.stack(mats, axis=0)


def _pool_row_mat(Hin, B):
    """(Hin//2*B, Hin*B): 0.5 where batch matches and y//2 == y2."""
    Hout = Hin // 2
    r_y2, r_b = jnp.divmod(jnp.arange(Hout * B), B)
    c_y, c_b = jnp.divmod(jnp.arange(Hin * B), B)
    m = (r_b[:, None] == c_b[None, :]) & (r_y2[:, None] == (c_y[None, :] // 2))
    return 0.5 * m.astype(jnp.float32)


def _pool_col_mat(Win, C):
    """(Win*C, Win//2*C): 0.5 where channel matches and x//2 == x2."""
    Wout = Win // 2
    r_x, r_c = jnp.divmod(jnp.arange(Win * C), C)
    c_x2, c_c = jnp.divmod(jnp.arange(Wout * C), C)
    m = (r_c[:, None] == c_c[None, :]) & ((r_x[:, None] // 2) == c_x2[None, :])
    return 0.5 * m.astype(jnp.float32)


def prepare_params(p, batch_size):
    """One-time repack of PyTorch-layout params into kernel operands (bf16)."""
    B = batch_size
    bf16, f32 = jnp.bfloat16, jnp.float32

    # conv1: taps stacked on the contraction axis -> (5*32, 168)
    k1 = _conv_band_mats(p["conv1_w"], Wp=32, Wo=28).reshape(5 * 32, 168)

    # conv2: taps stacked, each tap zero-padded from 84 to 128 rows so the
    # in-kernel lane-concat pieces are 128-wide / 128-aligned -> (5*128, 160)
    k2 = _conv_band_mats(p["conv2_w"], Wp=14, Wo=10)            # (5, 84, 160)
    k2 = jnp.pad(k2, ((0, 0), (0, 128 - 84), (0, 0))).reshape(5 * 128, 160)

    # fc1: PyTorch flatten order (f, y, x) -> [y, (x,f), o], y stacked on K,
    # each y-block zero-padded 80 -> 128 rows -> (5*128, 120)
    w1 = (p["fc1_w"].reshape(120, 16, 5, 5)
                    .transpose(2, 3, 1, 0)
                    .reshape(5, 80, 120))
    w1 = jnp.pad(w1, ((0, 0), (0, 128 - 80), (0, 0))).reshape(5 * 128, 120)

    # pool column matrices, zero-padded on the output-lane axis to 128
    pw1 = jnp.pad(_pool_col_mat(28, 6), ((0, 0), (0, 128 - 84)))   # (168, 128)
    pw2 = jnp.pad(_pool_col_mat(10, 16), ((0, 0), (0, 128 - 80)))  # (160, 128)

    # packed biases: one (5, 168) f32 operand instead of five (1, N) rows
    def _brow(v):
        return jnp.pad(v, (0, 168 - v.shape[0]))
    biases = jnp.stack([
        _brow(jnp.tile(p["conv1_b"], 28)),       # (168,)  lanes = x*6 + f
        _brow(jnp.tile(p["conv2_b"], 10)),       # (160,)  lanes = x*16 + f
        _brow(p["fc1_b"]),                       # (120,)
        _brow(p["fc2_b"]),                       # (84,)
        _brow(p["fc3_b"]),                       # (10,)
    ]).astype(f32)

    return {
        "k1": k1.astype(bf16),
        "ph1": _pool_row_mat(28, B).astype(bf16),   # (14B, 28B)
        "pw1": pw1.astype(bf16),
        "k2": k2.astype(bf16),
        "ph2": _pool_row_mat(10, B).astype(bf16),   # (5B, 10B)
        "pw2": pw2.astype(bf16),
        "w1": w1.astype(bf16),
        "w2": p["fc2_w"].T.astype(bf16),
        "w3": p["fc3_w"].T.astype(bf16),
        "biases": biases,
    }


# ------------------------------ forward pass --------------------------------

def lenet_forward(prep, x):
    """x: (B, 1, 28, 28) f32 -> (B, 10) softmax probabilities."""
    B = x.shape[0]
    # Single XLA glue op: repack input to rows=(h-major, b-minor), apply
    # conv1's zero padding, and lane-concatenate the 5 tap-shifted slices so
    # conv1 is one fused-K matmul.  Output is bf16 (cast once, half the DMA).
    # TODO(synk): at large batch fold this into the kernel behind a batch grid.
    xt = jnp.transpose(x[:, 0, :, :], (1, 0, 2))               # (28, B, 28)
    xt = jnp.pad(xt, ((2, 2), (0, 0), (2, 2)))                 # (32, B, 32)
    xcat = jnp.concatenate([xt[i:i + 28] for i in range(5)], axis=2)  # (28,B,160)
    xcat = xcat.reshape(28 * B, 160).astype(jnp.bfloat16)

    vmem = pl.BlockSpec(memory_space=pltpu.MemorySpace.VMEM)
    return pl.pallas_call(
        _lenet_fused_kernel,
        out_shape=jax.ShapeDtypeStruct((B, 10), jnp.float32),
        in_specs=[vmem] * 11,
        out_specs=vmem,
    )(xcat, prep["k1"], prep["ph1"], prep["pw1"],
      prep["k2"], prep["ph2"], prep["pw2"],
      prep["w1"], prep["w2"], prep["w3"], prep["biases"])


# --------------------------- pure-JAX reference ------------------------------

def lenet_reference(p, x):
    y = jax.lax.conv_general_dilated(
        x, p["conv1_w"], (1, 1), ((2, 2), (2, 2)),
        dimension_numbers=("NCHW", "OIHW", "NCHW"))
    y = jax.nn.sigmoid(y + p["conv1_b"][None, :, None, None])
    y = y.reshape(y.shape[0], 6, 14, 2, 14, 2).mean(axis=(3, 5))
    y = jax.lax.conv_general_dilated(
        y, p["conv2_w"], (1, 1), ((0, 0), (0, 0)),
        dimension_numbers=("NCHW", "OIHW", "NCHW"))
    y = jax.nn.sigmoid(y + p["conv2_b"][None, :, None, None])
    y = y.reshape(y.shape[0], 16, 5, 2, 5, 2).mean(axis=(3, 5))
    y = y.reshape(y.shape[0], -1)
    y = jax.nn.sigmoid(y @ p["fc1_w"].T + p["fc1_b"])
    y = jax.nn.sigmoid(y @ p["fc2_w"].T + p["fc2_b"])
    y = y @ p["fc3_w"].T + p["fc3_b"]
    return jax.nn.softmax(y, axis=-1)


def init_params(key):
    ks = jax.random.split(key, 10)
    scale = 0.1
    return {
        # PyTorch layouts: conv (Cout, Cin, kh, kw), linear (out, in)
        "conv1_w": scale * jax.random.normal(ks[0], (6, 1, 5, 5), jnp.float32),
        "conv1_b": scale * jax.random.normal(ks[1], (6,), jnp.float32),
        "conv2_w": scale * jax.random.normal(ks[2], (16, 6, 5, 5), jnp.float32),
        "conv2_b": scale * jax.random.normal(ks[3], (16,), jnp.float32),
        "fc1_w": scale * jax.random.normal(ks[4], (120, 400), jnp.float32),
        "fc1_b": scale * jax.random.normal(ks[5], (120,), jnp.float32),
        "fc2_w": scale * jax.random.normal(ks[6], (84, 120), jnp.float32),
        "fc2_b": scale * jax.random.normal(ks[7], (84,), jnp.float32),
        "fc3_w": scale * jax.random.normal(ks[8], (10, 84), jnp.float32),
        "fc3_b": scale * jax.random.normal(ks[9], (10,), jnp.float32),
    }


if __name__ == "__main__":
    key = jax.random.PRNGKey(0)
    pkey, xkey = jax.random.split(key)
    params = init_params(pkey)

    # LeNet's fc1 (16*5*5 = 400) fixes the input to 1 channel, 28x28 spatial.
    B = 2
    x = jax.random.normal(xkey, (B, 1, 28, 28), jnp.float32)

    prep = prepare_params(params, batch_size=B)     # one-time weight repack
    fwd = jax.jit(lenet_forward)
    out = jax.block_until_ready(fwd(prep, x))

    assert out.shape == (B, 10), out.shape
    assert bool(jnp.all(jnp.isfinite(out)))
    # softmax rows sum to ~1 (exact divide in-kernel)
    assert bool(jnp.allclose(jnp.sum(out, axis=1), 1.0, atol=1e-3))

    # cross-check against a pure-JAX/XLA reference of the PyTorch module
    ref = jax.block_until_ready(jax.jit(lenet_reference)(params, x))
    assert bool(jnp.allclose(out, ref, atol=2e-2)), float(jnp.max(jnp.abs(out - ref)))

    print("KERNEL_OK")
</pallas_src>

<mosaic_0001>
module attributes {stable_mosaic.version = 11 : i64} {
  func.func @_lenet_fused_kernel(%arg0: memref<56x160xbf16, #tpu.memory_space<vmem>>, %arg1: memref<160x168xbf16, #tpu.memory_space<vmem>>, %arg2: memref<28x56xbf16, #tpu.memory_space<vmem>>, %arg3: memref<168x128xbf16, #tpu.memory_space<vmem>>, %arg4: memref<640x160xbf16, #tpu.memory_space<vmem>>, %arg5: memref<10x20xbf16, #tpu.memory_space<vmem>>, %arg6: memref<160x128xbf16, #tpu.memory_space<vmem>>, %arg7: memref<640x120xbf16, #tpu.memory_space<vmem>>, %arg8: memref<120x84xbf16, #tpu.memory_space<vmem>>, %arg9: memref<84x10xbf16, #tpu.memory_space<vmem>>, %arg10: memref<5x168xf32, #tpu.memory_space<vmem>>, %arg11: memref<2x10xf32, #tpu.memory_space<vmem>>) attributes {dimension_semantics = [], scalar_prefetch = 0 : i64, scratch_operands = 0 : i64, tpu.core_type = #tpu.core_type<tc>} {
    %c0 = arith.constant 0 : index
    %c0_0 = arith.constant 0 : index
    %0 = vector.load %arg10[%c0, %c0_0] : memref<5x168xf32, #tpu.memory_space<vmem>>, vector<5x168xf32>
    %c0_1 = arith.constant 0 : index
    %c0_2 = arith.constant 0 : index
    %1 = vector.load %arg0[%c0_1, %c0_2] : memref<56x160xbf16, #tpu.memory_space<vmem>>, vector<56x160xbf16>
    %c0_3 = arith.constant 0 : index
    %c0_4 = arith.constant 0 : index
    %2 = vector.load %arg1[%c0_3, %c0_4] : memref<160x168xbf16, #tpu.memory_space<vmem>>, vector<160x168xbf16>
    %cst = arith.constant dense<0.000000e+00> : vector<56x168xf32>
    %3 = tpu.matmul %1, %2, %cst {dimension_numbers = #tpu.dot_dimension_numbers<[1], [0], [0], [1], [0, 0, 1, 1], [], []>} : vector<56x160xbf16>, vector<160x168xbf16>, vector<56x168xf32> -> vector<56x168xf32>
    %4 = vector.extract_strided_slice %0 {offsets = [0, 0], sizes = [1, 168], strides = [1, 1]} : vector<5x168xf32> to vector<1x168xf32>
    %5 = vector.broadcast %4 : vector<1x168xf32> to vector<56x168xf32>
    %6 = arith.addf %3, %5 : vector<56x168xf32>
    %cst_5 = arith.constant 5.000000e-01 : f32
    %7 = vector.broadcast %cst_5 : f32 to vector<56x168xf32>
    %8 = arith.mulf %7, %6 : vector<56x168xf32>
    %9 = math.tanh %8 : vector<56x168xf32>
    %cst_6 = arith.constant 5.000000e-01 : f32
    %10 = vector.broadcast %cst_6 : f32 to vector<56x168xf32>
    %11 = arith.mulf %10, %9 : vector<56x168xf32>
    %cst_7 = arith.constant 5.000000e-01 : f32
    %12 = vector.broadcast %cst_7 : f32 to vector<56x168xf32>
    %13 = arith.addf %11, %12 : vector<56x168xf32>
    %c0_8 = arith.constant 0 : index
    %c0_9 = arith.constant 0 : index
    %14 = vector.load %arg2[%c0_8, %c0_9] : memref<28x56xbf16, #tpu.memory_space<vmem>>, vector<28x56xbf16>
    %15 = arith.truncf %13 : vector<56x168xf32> to vector<56x168xbf16>
    %cst_10 = arith.constant dense<0.000000e+00> : vector<28x168xf32>
    %16 = tpu.matmul %14, %15, %cst_10 {dimension_numbers = #tpu.dot_dimension_numbers<[1], [0], [0], [1], [0, 0, 1, 1], [], []>} : vector<28x56xbf16>, vector<56x168xbf16>, vector<28x168xf32> -> vector<28x168xf32>
    %17 = arith.truncf %16 : vector<28x168xf32> to vector<28x168xbf16>
    %c0_11 = arith.constant 0 : index
    %c0_12 = arith.constant 0 : index
    %18 = vector.load %arg3[%c0_11, %c0_12] : memref<168x128xbf16, #tpu.memory_space<vmem>>, vector<168x128xbf16>
    %cst_13 = arith.constant dense<0.000000e+00> : vector<28x128xf32>
    %19 = tpu.matmul %17, %18, %cst_13 {dimension_numbers = #tpu.dot_dimension_numbers<[1], [0], [0], [1], [0, 0, 1, 1], [], []>} : vector<28x168xbf16>, vector<168x128xbf16>, vector<28x128xf32> -> vector<28x128xf32>
    %20 = vector.extract_strided_slice %19 {offsets = [0, 0], sizes = [20, 128], strides = [1, 1]} : vector<28x128xf32> to vector<20x128xf32>
    %21 = vector.extract_strided_slice %19 {offsets = [2, 0], sizes = [20, 128], strides = [1, 1]} : vector<28x128xf32> to vector<20x128xf32>
    %22 = vector.extract_strided_slice %19 {offsets = [4, 0], sizes = [20, 128], strides = [1, 1]} : vector<28x128xf32> to vector<20x128xf32>
    %23 = vector.extract_strided_slice %19 {offsets = [6, 0], sizes = [20, 128], strides = [1, 1]} : vector<28x128xf32> to vector<20x128xf32>
    %24 = vector.extract_strided_slice %19 {offsets = [8, 0], sizes = [20, 128], strides = [1, 1]} : vector<28x128xf32> to vector<20x128xf32>
    %25 = tpu.concatenate %20, %21, %22, %23, %24 in 1 : vector<20x128xf32>, vector<20x128xf32>, vector<20x128xf32>, vector<20x128xf32>, vector<20x128xf32> -> vector<20x640xf32>
    %26 = arith.truncf %25 : vector<20x640xf32> to vector<20x640xbf16>
    %c0_14 = arith.constant 0 : index
    %c0_15 = arith.constant 0 : index
    %27 = vector.load %arg4[%c0_14, %c0_15] : memref<640x160xbf16, #tpu.memory_space<vmem>>, vector<640x160xbf16>
    %cst_16 = arith.constant dense<0.000000e+00> : vector<20x160xf32>
    %28 = tpu.matmul %26, %27, %cst_16 {dimension_numbers = #tpu.dot_dimension_numbers<[1], [0], [0], [1], [0, 0, 1, 1], [], []>} : vector<20x640xbf16>, vector<640x160xbf16>, vector<20x160xf32> -> vector<20x160xf32>
    %29 = vector.extract_strided_slice %0 {offsets = [1, 0], sizes = [1, 160], strides = [1, 1]} : vector<5x168xf32> to vector<1x160xf32>
    %30 = vector.broadcast %29 : vector<1x160xf32> to vector<20x160xf32>
    %31 = arith.addf %28, %30 : vector<20x160xf32>
    %cst_17 = arith.constant 5.000000e-01 : f32
    %32 = vector.broadcast %cst_17 : f32 to vector<20x160xf32>
    %33 = arith.mulf %32, %31 : vector<20x160xf32>
    %34 = math.tanh %33 : vector<20x160xf32>
    %cst_18 = arith.constant 5.000000e-01 : f32
    %35 = vector.broadcast %cst_18 : f32 to vector<20x160xf32>
    %36 = arith.mulf %35, %34 : vector<20x160xf32>
    %cst_19 = arith.constant 5.000000e-01 : f32
    %37 = vector.broadcast %cst_19 : f32 to vector<20x160xf32>
    %38 = arith.addf %36, %37 : vector<20x160xf32>
    %c0_20 = arith.constant 0 : index
    %c0_21 = arith.constant 0 : index
    %39 = vector.load %arg5[%c0_20, %c0_21] : memref<10x20xbf16, #tpu.memory_space<vmem>>, vector<10x20xbf16>
    %40 = arith.truncf %38 : vector<20x160xf32> to vector<20x160xbf16>
    %cst_22 = arith.constant dense<0.000000e+00> : vector<10x160xf32>
    %41 = tpu.matmul %39, %40, %cst_22 {dimension_numbers = #tpu.dot_dimension_numbers<[1], [0], [0], [1], [0, 0, 1, 1], [], []>} : vector<10x20xbf16>, vector<20x160xbf16>, vector<10x160xf32> -> vector<10x160xf32>
    %42 = arith.truncf %41 : vector<10x160xf32> to vector<10x160xbf16>
    %c0_23 = arith.constant 0 : index
    %c0_24 = arith.constant 0 : index
    %43 = vector.load %arg6[%c0_23, %c0_24] : memref<160x128xbf16, #tpu.memory_space<vmem>>, vector<160x128xbf16>
    %cst_25 = arith.constant dense<0.000000e+00> : vector<10x128xf32>
    %44 = tpu.matmul %42, %43, %cst_25 {dimension_numbers = #tpu.dot_dimension_numbers<[1], [0], [0], [1], [0, 0, 1, 1], [], []>} : vector<10x160xbf16>, vector<160x128xbf16>, vector<10x128xf32> -> vector<10x128xf32>
    %45 = vector.extract_strided_slice %44 {offsets = [0, 0], sizes = [2, 128], strides = [1, 1]} : vector<10x128xf32> to vector<2x128xf32>
    %46 = vector.extract_strided_slice %44 {offsets = [2, 0], sizes = [2, 128], strides = [1, 1]} : vector<10x128xf32> to vector<2x128xf32>
    %47 = vector.extract_strided_slice %44 {offsets = [4, 0], sizes = [2, 128], strides = [1, 1]} : vector<10x128xf32> to vector<2x128xf32>
    %48 = vector.extract_strided_slice %44 {offsets = [6, 0], sizes = [2, 128], strides = [1, 1]} : vector<10x128xf32> to vector<2x128xf32>
    %49 = vector.extract_strided_slice %44 {offsets = [8, 0], sizes = [2, 128], strides = [1, 1]} : vector<10x128xf32> to vector<2x128xf32>
    %50 = tpu.concatenate %45, %46, %47, %48, %49 in 1 : vector<2x128xf32>, vector<2x128xf32>, vector<2x128xf32>, vector<2x128xf32>, vector<2x128xf32> -> vector<2x640xf32>
    %51 = arith.truncf %50 : vector<2x640xf32> to vector<2x640xbf16>
    %c0_26 = arith.constant 0 : index
    %c0_27 = arith.constant 0 : index
    %52 = vector.load %arg7[%c0_26, %c0_27] : memref<640x120xbf16, #tpu.memory_space<vmem>>, vector<640x120xbf16>
    %cst_28 = arith.constant dense<0.000000e+00> : vector<2x120xf32>
    %53 = tpu.matmul %51, %52, %cst_28 {dimension_numbers = #tpu.dot_dimension_numbers<[1], [0], [0], [1], [0, 0, 1, 1], [], []>} : vector<2x640xbf16>, vector<640x120xbf16>, vector<2x120xf32> -> vector<2x120xf32>
    %54 = vector.extract_strided_slice %0 {offsets = [2, 0], sizes = [1, 120], strides = [1, 1]} : vector<5x168xf32> to vector<1x120xf32>
    %55 = vector.broadcast %54 : vector<1x120xf32> to vector<2x120xf32>
    %56 = arith.addf %53, %55 : vector<2x120xf32>
    %cst_29 = arith.constant 5.000000e-01 : f32
    %57 = vector.broadcast %cst_29 : f32 to vector<2x120xf32>
    %58 = arith.mulf %57, %56 : vector<2x120xf32>
    %59 = math.tanh %58 : vector<2x120xf32>
    %cst_30 = arith.constant 5.000000e-01 : f32
    %60 = vector.broadcast %cst_30 : f32 to vector<2x120xf32>
    %61 = arith.mulf %60, %59 : vector<2x120xf32>
    %cst_31 = arith.constant 5.000000e-01 : f32
    %62 = vector.broadcast %cst_31 : f32 to vector<2x120xf32>
    %63 = arith.addf %61, %62 : vector<2x120xf32>
    %64 = arith.truncf %63 : vector<2x120xf32> to vector<2x120xbf16>
    %c0_32 = arith.constant 0 : index
    %c0_33 = arith.constant 0 : index
    %65 = vector.load %arg8[%c0_32, %c0_33] : memref<120x84xbf16, #tpu.memory_space<vmem>>, vector<120x84xbf16>
    %cst_34 = arith.constant dense<0.000000e+00> : vector<2x84xf32>
    %66 = tpu.matmul %64, %65, %cst_34 {dimension_numbers = #tpu.dot_dimension_numbers<[1], [0], [0], [1], [0, 0, 1, 1], [], []>} : vector<2x120xbf16>, vector<120x84xbf16>, vector<2x84xf32> -> vector<2x84xf32>
    %67 = vector.extract_strided_slice %0 {offsets = [3, 0], sizes = [1, 84], strides = [1, 1]} : vector<5x168xf32> to vector<1x84xf32>
    %68 = vector.broadcast %67 : vector<1x84xf32> to vector<2x84xf32>
    %69 = arith.addf %66, %68 : vector<2x84xf32>
    %cst_35 = arith.constant 5.000000e-01 : f32
    %70 = vector.broadcast %cst_35 : f32 to vector<2x84xf32>
    %71 = arith.mulf %70, %69 : vector<2x84xf32>
    %72 = math.tanh %71 : vector<2x84xf32>
    %cst_36 = arith.constant 5.000000e-01 : f32
    %73 = vector.broadcast %cst_36 : f32 to vector<2x84xf32>
    %74 = arith.mulf %73, %72 : vector<2x84xf32>
    %cst_37 = arith.constant 5.000000e-01 : f32
    %75 = vector.broadcast %cst_37 : f32 to vector<2x84xf32>
    %76 = arith.addf %74, %75 : vector<2x84xf32>
    %77 = arith.truncf %76 : vector<2x84xf32> to vector<2x84xbf16>
    %c0_38 = arith.constant 0 : index
    %c0_39 = arith.constant 0 : index
    %78 = vector.load %arg9[%c0_38, %c0_39] : memref<84x10xbf16, #tpu.memory_space<vmem>>, vector<84x10xbf16>
    %cst_40 = arith.constant dense<0.000000e+00> : vector<2x10xf32>
    %79 = tpu.matmul %77, %78, %cst_40 {dimension_numbers = #tpu.dot_dimension_numbers<[1], [0], [0], [1], [0, 0, 1, 1], [], []>} : vector<2x84xbf16>, vector<84x10xbf16>, vector<2x10xf32> -> vector<2x10xf32>
    %80 = vector.extract_strided_slice %0 {offsets = [4, 0], sizes = [1, 10], strides = [1, 1]} : vector<5x168xf32> to vector<1x10xf32>
    %81 = vector.broadcast %80 : vector<1x10xf32> to vector<2x10xf32>
    %82 = arith.addf %79, %81 : vector<2x10xf32>
    %cst_41 = arith.constant dense<0xFF800000> : vector<2xf32>
    %83 = vector.multi_reduction <maximumf>, %82, %cst_41 [1] : vector<2x10xf32> to vector<2xf32>
    %84 = vector.shape_cast %83 : vector<2xf32> to vector<2x1xf32>
    %85 = vector.broadcast %84 : vector<2x1xf32> to vector<2x10xf32>
    %86 = arith.subf %82, %85 : vector<2x10xf32>
    %87 = math.exp %86 : vector<2x10xf32>
    %cst_42 = arith.constant dense<0.000000e+00> : vector<2xf32>
    %88 = vector.multi_reduction <add>, %87, %cst_42 [1] : vector<2x10xf32> to vector<2xf32>
    %89 = vector.shape_cast %88 : vector<2xf32> to vector<2x1xf32>
    %90 = vector.broadcast %89 : vector<2x1xf32> to vector<2x10xf32>
    %91 = arith.divf %87, %90 : vector<2x10xf32>
    %c0_43 = arith.constant 0 : index
    %c0_44 = arith.constant 0 : index
    %92 = vector.load %arg11[%c0_43, %c0_44] : memref<2x10xf32, #tpu.memory_space<vmem>>, vector<2x10xf32>
    tpu.vector_store %arg11[%c0_43, %c0_44], %91 {strides = array<i32>} : memref<2x10xf32, #tpu.memory_space<vmem>>, vector<2x10xf32>,
    return
  }
}

</mosaic_0001>

<llo_original>
// kernel: lenet_forward.1
$region0: #{lenet_forward.1}
  #allocation0 [shape = 'u32[]', space=smem, size = 0x4, offset = 0x4, fixed_abs, tag = 'smem constant byte address 0x4 - core index']
  #allocation1 [shape = 'u32[72,128]{1,0:T(1,128)}', space=vmem, size = 0x9000, scoped, tag = 'internal scratch']
  %s0 = inlined_call_operand.vmem [shape: bf16[56,160], index: 0, kind: input, shape index: {}]
  %s1 = inlined_call_operand.vmem [shape: bf16[160,168], index: 1, kind: input, shape index: {}]
  %s2 = inlined_call_operand.vmem [shape: bf16[28,56], index: 2, kind: input, shape index: {}]
  %s3 = inlined_call_operand.vmem [shape: bf16[168,128], index: 3, kind: input, shape index: {}]
  %s4 = inlined_call_operand.vmem [shape: bf16[640,160], index: 4, kind: input, shape index: {}]
  %s5 = inlined_call_operand.vmem [shape: bf16[10,20], index: 5, kind: input, shape index: {}]
  %s6 = inlined_call_operand.vmem [shape: bf16[160,128], index: 6, kind: input, shape index: {}]
  %s7 = inlined_call_operand.vmem [shape: bf16[640,120], index: 7, kind: input, shape index: {}]
  %s8 = inlined_call_operand.vmem [shape: bf16[120,84], index: 8, kind: input, shape index: {}]
  %s9 = inlined_call_operand.vmem [shape: bf16[84,10], index: 9, kind: input, shape index: {}]
  %s10 = inlined_call_operand.vmem [shape: f32[5,168], index: 10, kind: input, shape index: {}]
  %s11 = inlined_call_operand.hbm [shape: f32[2,10], index: 11, kind: output, shape index: {}]
  %s12 = sld [smem:[#allocation0]]
  $region54: #{lenet_forward.1} parent=0
    _
  %s14 = ssub.s32 1, %s12
  %s15 = scalar_select 0, %s14, %s12
  $region1: #{lenet_forward.1} parent=0
    #allocation2 [shape = 'u8[1024]{0}', space=vmem, size = 0x400, scoped, tag = 'output window, operand 0, single buffered']
    #allocation3 [shape = 's32[1]{0}', space=sflag, size = 0x4, scoped, tag = 'scoped memory for lenet_forward.1']
    %16 = vsyncpa [#allocation3], 0
    // Predicated region
    $region2: #{lenet_forward.1} parent=1 // pred_check
      _
    $region3: #{lenet_forward.1} parent=1 // pred_check_branch
      %18 = sbr.rel (0) target = $region5
    $region4: #{lenet_forward.1} parent=1 // pred_region
      _
    $region5: #{lenet_forward.1} parent=1 // pred_fallthru
      _
    // Predicated region
    $region6: #{lenet_forward.1} parent=1 // pred_check
      _
    $region7: #{lenet_forward.1} parent=1 // pred_check_branch
      %20 = sbr.rel (0) target = $region9
    $region8: #{lenet_forward.1} parent=1 // pred_region
      _
    $region9: #{lenet_forward.1} parent=1 // pred_fallthru
      _
    // Predicated region
    $region10: #{lenet_forward.1} parent=1 // pred_check
      _
    $region11: #{lenet_forward.1} parent=1 // pred_check_branch
      %22 = sbr.rel (0) target = $region13
    $region12: #{lenet_forward.1} parent=1 // pred_region
      _
    $region13: #{lenet_forward.1} parent=1 // pred_fallthru
      _
    // Predicated region
    $region14: #{lenet_forward.1} parent=1 // pred_check
      _
    $region15: #{lenet_forward.1} parent=1 // pred_check_branch
      %24 = sbr.rel (0) target = $region17
    $region16: #{lenet_forward.1} parent=1 // pred_region
      _
    $region17: #{lenet_forward.1} parent=1 // pred_fallthru
      _
    // Predicated region
    $region18: #{lenet_forward.1} parent=1 // pred_check
      _
    $region19: #{lenet_forward.1} parent=1 // pred_check_branch
      %26 = sbr.rel (0) target = $region21
    $region20: #{lenet_forward.1} parent=1 // pred_region
      _
    $region21: #{lenet_forward.1} parent=1 // pred_fallthru
      _
    // Predicated region
    $region22: #{lenet_forward.1} parent=1 // pred_check
      _
    $region23: #{lenet_forward.1} parent=1 // pred_check_branch
      %28 = sbr.rel (0) target = $region25
    $region24: #{lenet_forward.1} parent=1 // pred_region
      _
    $region25: #{lenet_forward.1} parent=1 // pred_fallthru
      _
    // Predicated region
    $region26: #{lenet_forward.1} parent=1 // pred_check
      _
    $region27: #{lenet_forward.1} parent=1 // pred_check_branch
      %30 = sbr.rel (0) target = $region29
    $region28: #{lenet_forward.1} parent=1 // pred_region
      _
    $region29: #{lenet_forward.1} parent=1 // pred_fallthru
      _
    // Predicated region
    $region30: #{lenet_forward.1} parent=1 // pred_check
      _
    $region31: #{lenet_forward.1} parent=1 // pred_check_branch
      %32 = sbr.rel (0) target = $region33
    $region32: #{lenet_forward.1} parent=1 // pred_region
      _
    $region33: #{lenet_forward.1} parent=1 // pred_fallthru
      _
    // Predicated region
    $region34: #{lenet_forward.1} parent=1 // pred_check
      _
    $region35: #{lenet_forward.1} parent=1 // pred_check_branch
      %34 = sbr.rel (0) target = $region37
    $region36: #{lenet_forward.1} parent=1 // pred_region
      _
    $region37: #{lenet_forward.1} parent=1 // pred_fallthru
      _
    // Predicated region
    $region38: #{lenet_forward.1} parent=1 // pred_check
      _
    $region39: #{lenet_forward.1} parent=1 // pred_check_branch
      %36 = sbr.rel (0) target = $region41
    $region40: #{lenet_forward.1} parent=1 // pred_region
      _
    $region41: #{lenet_forward.1} parent=1 // pred_fallthru
      _
    // Predicated region
    $region42: #{lenet_forward.1} parent=1 // pred_check
      _
    $region43: #{lenet_forward.1} parent=1 // pred_check_branch
      %38 = sbr.rel (0) target = $region45
    $region44: #{lenet_forward.1} parent=1 // pred_region
      _
    $region45: #{lenet_forward.1} parent=1 // pred_fallthru
      _
    %v40 = vld [vmem:[%s10] sm:$0x1f]
    %v41 = vld [vmem:[%s10 + $0x8] sm:$0x1f]
    %v42 = vld [vmem:[%s0] sm:$0xff]
    %v43 = vld [vmem:[%s0 + $0x8] sm:$0xff]
    %v44 = vld [vmem:[%s0 + $0x10] sm:$0xff]
    %v45 = vld [vmem:[%s0 + $0x18] sm:$0xff]
    %v46 = vld [vmem:[%s0 + $0x20] sm:$0xff]
    %v47 = vld [vmem:[%s0 + $0x28] sm:$0xff]
    %v48 = vld [vmem:[%s0 + $0x30] sm:$0xff]
    %v49 = vld [vmem:[%s1] sm:$0xff]
    %v50 = vld [vmem:[%s1 + $0x8] sm:$0xff]
    %v51 = vld [vmem:[%s1 + $0x10] sm:$0xff]
    %v52 = vld [vmem:[%s1 + $0x18] sm:$0xff]
    %v53 = vld [vmem:[%s1 + $0x20] sm:$0xff]
    %v54 = vld [vmem:[%s1 + $0x28] sm:$0xff]
    %v55 = vld [vmem:[%s1 + $0x30] sm:$0xff]
    %v56 = vld [vmem:[%s1 + $0x38] sm:$0xff]
    %v57 = vld [vmem:[%s1 + $0x40] sm:$0xff]
    %v58 = vld [vmem:[%s1 + $0x48] sm:$0xff]
    %v59 = vld [vmem:[%s1 + $0x50] sm:$0xff]
    %v60 = vld [vmem:[%s1 + $0x58] sm:$0xff]
    %v61 = vld [vmem:[%s1 + $0x60] sm:$0xff]
    %v62 = vld [vmem:[%s1 + $0x68] sm:$0xff]
    %v63 = vld [vmem:[%s1 + $0x70] sm:$0xff]
    %v64 = vld [vmem:[%s1 + $0x78] sm:$0xff]
    %v65 = vld [vmem:[%s1 + $0x80] sm:$0xff]
    %v66 = vld [vmem:[%s1 + $0x88] sm:$0xff]
    %v67 = vld [vmem:[%s1 + $0x90] sm:$0xff]
    %v68 = vld [vmem:[%s1 + $0x98] sm:$0xff]
    %v69 = vperm.slane %v40, 0
    %v70 = vperm.slane %v41, 0
    %v78 = vunpack.c.l.b16 %v42
    %v79 = vunpack.c.h.b16 %v42
    %v80 = vunpack.c.l.b16 %v43
    %v81 = vunpack.c.h.b16 %v43
    %v82 = vunpack.c.l.b16 %v44
    %v83 = vunpack.c.h.b16 %v44
    %v84 = vunpack.c.l.b16 %v45
    %v85 = vunpack.c.h.b16 %v45
    %v86 = vunpack.c.l.b16 %v46
    %v87 = vunpack.c.h.b16 %v46
    %v88 = vunpack.c.l.b16 %v47
    %v89 = vunpack.c.h.b16 %v47
    %v90 = vunpack.c.l.b16 %v48
    %v91 = vunpack.c.h.b16 %v48
    %v92 = vpack.c.b16 %v80, %v78
    %v93 = vpack.c.b16 %v81, %v79
    %v94 = vpack.c.b16 %v84, %v82
    %v95 = vpack.c.b16 %v85, %v83
    %v96 = vpack.c.b16 %v88, %v86
    %v97 = vpack.c.b16 %v89, %v87
    %v98 = vpack.c.b16 %v90, %v90
    %v99 = vpack.c.b16 %v91, %v91
    %v124 = vunpack.c.l.b16 %v49
    %v125 = vunpack.c.h.b16 %v49
    %v126 = vunpack.c.l.b16 %v50
    %v127 = vunpack.c.h.b16 %v50
    %v128 = vunpack.c.l.b16 %v51
    %v129 = vunpack.c.h.b16 %v51
    %v130 = vunpack.c.l.b16 %v52
    %v131 = vunpack.c.h.b16 %v52
    %v132 = vunpack.c.l.b16 %v53
    %v133 = vunpack.c.h.b16 %v53
    %v134 = vunpack.c.l.b16 %v54
    %v135 = vunpack.c.h.b16 %v54
    %v136 = vunpack.c.l.b16 %v55
    %v137 = vunpack.c.h.b16 %v55
    %v138 = vunpack.c.l.b16 %v56
    %v139 = vunpack.c.h.b16 %v56
    %v140 = vunpack.c.l.b16 %v57
    %v141 = vunpack.c.h.b16 %v57
    %v142 = vunpack.c.l.b16 %v58
    %v143 = vunpack.c.h.b16 %v58
    %v144 = vunpack.c.l.b16 %v59
    %v145 = vunpack.c.h.b16 %v59
    %v146 = vunpack.c.l.b16 %v60
    %v147 = vunpack.c.h.b16 %v60
    %v148 = vunpack.c.l.b16 %v61
    %v149 = vunpack.c.h.b16 %v61
    %v150 = vunpack.c.l.b16 %v62
    %v151 = vunpack.c.h.b16 %v62
    %v152 = vunpack.c.l.b16 %v63
    %v153 = vunpack.c.h.b16 %v63
    %v154 = vunpack.c.l.b16 %v64
    %v155 = vunpack.c.h.b16 %v64
    %v156 = vunpack.c.l.b16 %v65
    %v157 = vunpack.c.h.b16 %v65
    %v158 = vunpack.c.l.b16 %v66
    %v159 = vunpack.c.h.b16 %v66
    %v160 = vunpack.c.l.b16 %v67
    %v161 = vunpack.c.h.b16 %v67
    %v162 = vunpack.c.l.b16 %v68
    %v163 = vunpack.c.h.b16 %v68
    %v164 = vpack.c.b16 %v126, %v124
    %v165 = vpack.c.b16 %v127, %v125
    %v166 = vpack.c.b16 %v130, %v128
    %v167 = vpack.c.b16 %v131, %v129
    %v168 = vpack.c.b16 %v134, %v132
    %v169 = vpack.c.b16 %v135, %v133
    %v170 = vpack.c.b16 %v138, %v136
    %v171 = vpack.c.b16 %v139, %v137
    %v172 = vpack.c.b16 %v142, %v140
    %v173 = vpack.c.b16 %v143, %v141
    %v174 = vpack.c.b16 %v146, %v144
    %v175 = vpack.c.b16 %v147, %v145
    %v176 = vpack.c.b16 %v150, %v148
    %v177 = vpack.c.b16 %v151, %v149
    %v178 = vpack.c.b16 %v154, %v152
    %v179 = vpack.c.b16 %v155, %v153
    %v180 = vpack.c.b16 %v158, %v156
    %v181 = vpack.c.b16 %v159, %v157
    %v182 = vpack.c.b16 %v162, %v160
    %v183 = vpack.c.b16 %v163, %v161
    %vm204 = vcmask 261120
    %v206 = vsel %vm204, %v93, 0
    %v209 = vsel %vm204, %v95, 0
    %v212 = vsel %vm204, %v97, 0
    %v215 = vsel %vm204, %v99, 0
    %217 = vmatpush.bf16.msra.mxu0 %v178
    %218 = vmatpush.bf16.msra.mxu0 %v176
    %219 = vmatpush.bf16.msra.mxu0 %v174
    %220 = vmatpush.bf16.msra.mxu0 %v172
    %221 = vmatpush.bf16.msra.mxu0 %v170
    %222 = vmatpush.bf16.msra.mxu0 %v168
    %223 = vmatpush.bf16.msra.mxu0 %v166
    %224 = vmatpush.bf16.msra.mxu0 %v164
    %225 = vmatmul.bf16.gmra.mxu0 %v92
    %v226 = vpop.f32.mrf.mxu0
    %v227 = vadd.f32 %v69, %v226
    %v228 = vpop.f32.mrf.mxu0
    %v229 = vadd.f32 %v69, %v228
    %230 = vmatmul.bf16.gmra.mxu0 %v94
    %v231 = vpop.f32.mrf.mxu0
    %v232 = vadd.f32 %v69, %v231
    %v233 = vpop.f32.mrf.mxu0
    %v234 = vadd.f32 %v69, %v233
    %235 = vmatmul.bf16.gmra.mxu0 %v96
    %v236 = vpop.f32.mrf.mxu0
    %v237 = vadd.f32 %v69, %v236
    %v238 = vpop.f32.mrf.mxu0
    %v239 = vadd.f32 %v69, %v238
    %240 = vmatmul.bf16.gmra.mxu0 %v98
    %v241 = vpop.f32.mrf.mxu0
    %v242 = vadd.f32 %v69, %v241
    %v243 = vpop.f32.mrf.mxu0
    %244 = vdwg.mxu0
    %245 = vmatpush.bf16.msra.mxu0 0
    %246 = vmatpush.bf16.msra.mxu0 0
    %247 = vmatpush.bf16.msra.mxu0 0
    %248 = vmatpush.bf16.msra.mxu0 0
    %249 = vmatpush.bf16.msra.mxu0 0
    %250 = vmatpush.bf16.msra.mxu0 0
    %251 = vmatpush.bf16.msra.mxu0 %v182
    %252 = vmatpush.bf16.msra.mxu0 %v180
    %253 = vmatmul.bf16.gmra.mxu0 %v206
    %v254 = vpop.f32.mrf.mxu0
    %v255 = vadd.f32 %v227, %v254
    %v256 = vpop.f32.mrf.mxu0
    %v257 = vadd.f32 %v229, %v256
    %258 = vmatmul.bf16.gmra.mxu0 %v209
    %v259 = vpop.f32.mrf.mxu0
    %v260 = vadd.f32 %v232, %v259
    %v261 = vpop.f32.mrf.mxu0
    %v262 = vadd.f32 %v234, %v261
    %263 = vmatmul.bf16.gmra.mxu0 %v212
    %v264 = vpop.f32.mrf.mxu0
    %v265 = vadd.f32 %v237, %v264
    %v266 = vpop.f32.mrf.mxu0
    %v267 = vadd.f32 %v239, %v266
    %268 = vmatmul.bf16.gmra.mxu0 %v215
    %v269 = vpop.f32.mrf.mxu0
    %v270 = vadd.f32 %v242, %v269
    %v271 = vpop.f32.mrf.mxu0
    %272 = vdwg.mxu0
    %273 = vmatpush.bf16.msra.mxu0 %v179
    %274 = vmatpush.bf16.msra.mxu0 %v177
    %275 = vmatpush.bf16.msra.mxu0 %v175
    %276 = vmatpush.bf16.msra.mxu0 %v173
    %277 = vmatpush.bf16.msra.mxu0 %v171
    %278 = vmatpush.bf16.msra.mxu0 %v169
    %279 = vmatpush.bf16.msra.mxu0 %v167
    %280 = vmatpush.bf16.msra.mxu0 %v165
    %281 = vmatmul.bf16.gmra.mxu0 %v92
    %v282 = vpop.f32.mrf.mxu0
    %v283 = vadd.f32 %v70, %v282
    %v284 = vpop.f32.mrf.mxu0
    %v285 = vadd.f32 %v70, %v284
    %286 = vmatmul.bf16.gmra.mxu0 %v94
    %v287 = vpop.f32.mrf.mxu0
    %v288 = vadd.f32 %v70, %v287
    %v289 = vpop.f32.mrf.mxu0
    %v290 = vadd.f32 %v70, %v289
    %291 = vmatmul.bf16.gmra.mxu0 %v96
    %v292 = vpop.f32.mrf.mxu0
    %v293 = vadd.f32 %v70, %v292
    %v294 = vpop.f32.mrf.mxu0
    %v295 = vadd.f32 %v70, %v294
    %296 = vmatmul.bf16.gmra.mxu0 %v98
    %v297 = vpop.f32.mrf.mxu0
    %v298 = vadd.f32 %v70, %v297
    %v299 = vpop.f32.mrf.mxu0
    %300 = vdwg.mxu0
    %301 = vmatpush.bf16.msra.mxu0 0
    %302 = vmatpush.bf16.msra.mxu0 0
    %303 = vmatpush.bf16.msra.mxu0 0
    %304 = vmatpush.bf16.msra.mxu0 0
    %305 = vmatpush.bf16.msra.mxu0 0
    %306 = vmatpush.bf16.msra.mxu0 0
    %307 = vmatpush.bf16.msra.mxu0 %v183
    %308 = vmatpush.bf16.msra.mxu0 %v181
    %309 = vmatmul.bf16.gmra.mxu0 %v206
    %v310 = vpop.f32.mrf.mxu0
    %v311 = vadd.f32 %v283, %v310
    %v312 = vpop.f32.mrf.mxu0
    %v313 = vadd.f32 %v285, %v312
    %314 = vmatmul.bf16.gmra.mxu0 %v209
    %v315 = vpop.f32.mrf.mxu0
    %v316 = vadd.f32 %v288, %v315
    %v317 = vpop.f32.mrf.mxu0
    %v318 = vadd.f32 %v290, %v317
    %319 = vmatmul.bf16.gmra.mxu0 %v212
    %v320 = vpop.f32.mrf.mxu0
    %v321 = vadd.f32 %v293, %v320
    %v322 = vpop.f32.mrf.mxu0
    %v323 = vadd.f32 %v295, %v322
    %324 = vmatmul.bf16.gmra.mxu0 %v215
    %v325 = vpop.f32.mrf.mxu0
    %v326 = vadd.f32 %v298, %v325
    %v327 = vpop.f32.mrf.mxu0
    %328 = vdwg.mxu0
    %v329 = vmul.f32 %v255, 0.5
    %v330 = vmul.f32 %v311, 0.5
    %v331 = vmul.f32 %v257, 0.5
    %v332 = vmul.f32 %v313, 0.5
    %v333 = vmul.f32 %v260, 0.5
    %v334 = vmul.f32 %v316, 0.5
    %v335 = vmul.f32 %v262, 0.5
    %v336 = vmul.f32 %v318, 0.5
    %v337 = vmul.f32 %v265, 0.5
    %v338 = vmul.f32 %v321, 0.5
    %v339 = vmul.f32 %v267, 0.5
    %v340 = vmul.f32 %v323, 0.5
    %v341 = vmul.f32 %v270, 0.5
    %v342 = vmul.f32 %v326, 0.5
    %v343 = vtanh.pop %v329
    %v344 = vtanh.pop %v330
    %v345 = vtanh.pop %v331
    %v346 = vtanh.pop %v332
    %v347 = vtanh.pop %v333
    %v348 = vtanh.pop %v334
    %v349 = vtanh.pop %v335
    %v350 = vtanh.pop %v336
    %v351 = vtanh.pop %v337
    %v352 = vtanh.pop %v338
    %v353 = vtanh.pop %v339
    %v354 = vtanh.pop %v340
    %v355 = vtanh.pop %v341
    %v356 = vtanh.pop %v342
    %v357 = vmul.f32 %v343, 0.5
    %v358 = vmul.f32 %v344, 0.5
    %v359 = vmul.f32 %v345, 0.5
    %v360 = vmul.f32 %v346, 0.5
    %v361 = vmul.f32 %v347, 0.5
    %v362 = vmul.f32 %v348, 0.5
    %v363 = vmul.f32 %v349, 0.5
    %v364 = vmul.f32 %v350, 0.5
    %v365 = vmul.f32 %v351, 0.5
    %v366 = vmul.f32 %v352, 0.5
    %v367 = vmul.f32 %v353, 0.5
    %v368 = vmul.f32 %v354, 0.5
    %v369 = vmul.f32 %v355, 0.5
    %v370 = vmul.f32 %v356, 0.5
    %v371 = vadd.f32 %v357, 0.5
    %v372 = vadd.f32 %v358, 0.5
    %v373 = vadd.f32 %v359, 0.5
    %v374 = vadd.f32 %v360, 0.5
    %v375 = vadd.f32 %v361, 0.5
    %v376 = vadd.f32 %v362, 0.5
    %v377 = vadd.f32 %v363, 0.5
    %v378 = vadd.f32 %v364, 0.5
    %v379 = vadd.f32 %v365, 0.5
    %v380 = vadd.f32 %v366, 0.5
    %v381 = vadd.f32 %v367, 0.5
    %v382 = vadd.f32 %v368, 0.5
    %v383 = vadd.f32 %v369, 0.5
    %v384 = vadd.f32 %v370, 0.5
    %v385 = vld [vmem:[%s2] sm:$0xf]
    %v386 = vld [vmem:[%s2 + $0x4] sm:$0xf]
    %v387 = vld [vmem:[%s2 + $0x8] sm:$0xf]
    %v388 = vld [vmem:[%s2 + $0xc] sm:$0x3]
    %v389 = vpack.c.bf16 %v373, %v371
    %v390 = vpack.c.bf16 %v374, %v372
    %v391 = vpack.c.bf16 %v377, %v375
    %v392 = vpack.c.bf16 %v378, %v376
    %v393 = vpack.c.bf16 %v381, %v379
    %v394 = vpack.c.bf16 %v382, %v380
    %v395 = vpack.c.bf16 %v383, %v383
    %v396 = vpack.c.bf16 %v384, %v384
    %v401 = vunpack.c.l.b16 %v385
    %v402 = vunpack.c.l.b16 %v386
    %v403 = vunpack.c.l.b16 %v387
    %v404 = vunpack.c.l.b16 %v388
    %v405 = vpack.c.b16 %v402, %v401
    %v406 = vpack.c.b16 %v404, %v403
    %vm407 = vcmask 457728
    %v409 = vsel %vm407, %v405, 0
    %v412 = vsel %vm407, %v406, 0
    %vm414 = vcmask 1043456
    %v416 = vsel %vm414, %v395, 0
    %v419 = vsel %vm414, %v396, 0
    %421 = vmatpush.bf16.msra.mxu0 0
    %422 = vmatpush.bf16.msra.mxu0 0
    %423 = vmatpush.bf16.msra.mxu0 0
    %424 = vmatpush.bf16.msra.mxu0 0
    %425 = vmatpush.bf16.msra.mxu0 %v416
    %426 = vmatpush.bf16.msra.mxu0 %v393
    %427 = vmatpush.bf16.msra.mxu0 %v391
    %428 = vmatpush.bf16.msra.mxu0 %v389
    %429 = vmatmul.bf16.gmra.mxu0 %v409
    %v430 = vpop.f32.mrf.mxu0
    %v431 = vadd.f32 0.0, %v430
    %v432 = vpop.f32.mrf.mxu0
    %v433 = vadd.f32 0.0, %v432
    %434 = vmatmul.bf16.gmra.mxu0 %v412
    %v435 = vpop.f32.mrf.mxu0
    %v436 = vadd.f32 0.0, %v435
    %v437 = vpop.f32.mrf.mxu0
    %v438 = vadd.f32 0.0, %v437
    %439 = vdwg.mxu0
    %440 = vmatpush.bf16.msra.mxu0 0
    %441 = vmatpush.bf16.msra.mxu0 0
    %442 = vmatpush.bf16.msra.mxu0 0
    %443 = vmatpush.bf16.msra.mxu0 0
    %444 = vmatpush.bf16.msra.mxu0 %v419
    %445 = vmatpush.bf16.msra.mxu0 %v394
    %446 = vmatpush.bf16.msra.mxu0 %v392
    %447 = vmatpush.bf16.msra.mxu0 %v390
    %448 = vmatmul.bf16.gmra.mxu0 %v409
    %v449 = vpop.f32.mrf.mxu0
    %v450 = vadd.f32 0.0, %v449
    %v451 = vpop.f32.mrf.mxu0
    %v452 = vadd.f32 0.0, %v451
    %453 = vmatmul.bf16.gmra.mxu0 %v412
    %v454 = vpop.f32.mrf.mxu0
    %v455 = vadd.f32 0.0, %v454
    %v456 = vpop.f32.mrf.mxu0
    %v457 = vadd.f32 0.0, %v456
    %458 = vdwg.mxu0
    %v459 = vpack.c.bf16 %v433, %v431
    %v460 = vpack.c.bf16 %v452, %v450
    %v461 = vpack.c.bf16 %v438, %v436
    %v462 = vpack.c.bf16 %v457, %v455
    %v463 = vld [vmem:[%s3] sm:$0xf]
    %v464 = vld [vmem:[%s3 + $0x4] sm:$0xf]
    %v465 = vld [vmem:[%s3 + $0x8] sm:$0xf]
    %v466 = vld [vmem:[%s3 + $0xc] sm:$0xf]
    %v467 = vld [vmem:[%s3 + $0x10] sm:$0xf]
    %v468 = vld [vmem:[%s3 + $0x14] sm:$0xf]
    %v469 = vld [vmem:[%s3 + $0x18] sm:$0xf]
    %v470 = vld [vmem:[%s3 + $0x1c] sm:$0xf]
    %v471 = vld [vmem:[%s3 + $0x20] sm:$0xf]
    %v472 = vld [vmem:[%s3 + $0x24] sm:$0xf]
    %v473 = vld [vmem:[%s3 + $0x28] sm:$0xf]
    %v474 = vld [vmem:[%s3 + $0x2c] sm:$0xf]
    %v475 = vld [vmem:[%s3 + $0x30] sm:$0xf]
    %v476 = vld [vmem:[%s3 + $0x34] sm:$0xf]
    %v477 = vld [vmem:[%s3 + $0x38] sm:$0xf]
    %v478 = vld [vmem:[%s3 + $0x3c] sm:$0xf]
    %v479 = vld [vmem:[%s3 + $0x40] sm:$0xf]
    %v480 = vld [vmem:[%s3 + $0x44] sm:$0xf]
    %v481 = vld [vmem:[%s3 + $0x48] sm:$0xf]
    %v482 = vld [vmem:[%s3 + $0x4c] sm:$0xf]
    %v483 = vld [vmem:[%s3 + $0x50] sm:$0xf]
    %v505 = vunpack.c.l.b16 %v463
    %v506 = vunpack.c.l.b16 %v464
    %v507 = vunpack.c.l.b16 %v465
    %v508 = vunpack.c.l.b16 %v466
    %v509 = vunpack.c.l.b16 %v467
    %v510 = vunpack.c.l.b16 %v468
    %v511 = vunpack.c.l.b16 %v469
    %v512 = vunpack.c.l.b16 %v470
    %v513 = vunpack.c.l.b16 %v471
    %v514 = vunpack.c.l.b16 %v472
    %v515 = vunpack.c.l.b16 %v473
    %v516 = vunpack.c.l.b16 %v474
    %v517 = vunpack.c.l.b16 %v475
    %v518 = vunpack.c.l.b16 %v476
    %v519 = vunpack.c.l.b16 %v477
    %v520 = vunpack.c.l.b16 %v478
    %v521 = vunpack.c.l.b16 %v479
    %v522 = vunpack.c.l.b16 %v480
    %v523 = vunpack.c.l.b16 %v481
    %v524 = vunpack.c.l.b16 %v482
    %v525 = vunpack.c.l.b16 %v483
    %v526 = vpack.c.b16 %v506, %v505
    %v527 = vpack.c.b16 %v508, %v507
    %v528 = vpack.c.b16 %v510, %v509
    %v529 = vpack.c.b16 %v512, %v511
    %v530 = vpack.c.b16 %v514, %v513
    %v531 = vpack.c.b16 %v516, %v515
    %v532 = vpack.c.b16 %v518, %v517
    %v533 = vpack.c.b16 %v520, %v519
    %v534 = vpack.c.b16 %v522, %v521
    %v535 = vpack.c.b16 %v524, %v523
    %v536 = vpack.c.b16 %v525, %v525
    %vm547 = vcmask 326656
    %v549 = vsel %vm547, %v460, 0
    %v552 = vsel %vm547, %v462, 0
    %v555 = vsel %vm414, %v536, 0
    %557 = vmatpush.bf16.msra.mxu0 %v533
    %558 = vmatpush.bf16.msra.mxu0 %v532
    %559 = vmatpush.bf16.msra.mxu0 %v531
    %560 = vmatpush.bf16.msra.mxu0 %v530
    %561 = vmatpush.bf16.msra.mxu0 %v529
    %562 = vmatpush.bf16.msra.mxu0 %v528
    %563 = vmatpush.bf16.msra.mxu0 %v527
    %564 = vmatpush.bf16.msra.mxu0 %v526
    %565 = vmatmul.bf16.gmra.mxu0 %v459
    %v566 = vpop.f32.mrf.mxu0
    %v567 = vadd.f32 0.0, %v566
    %v568 = vpop.f32.mrf.mxu0
    %v569 = vadd.f32 0.0, %v568
    %570 = vmatmul.bf16.gmra.mxu0 %v461
    %v571 = vpop.f32.mrf.mxu0
    %v572 = vadd.f32 0.0, %v571
    %v573 = vpop.f32.mrf.mxu0
    %v574 = vadd.f32 0.0, %v573
    %575 = vdwg.mxu0
    %576 = vmatpush.bf16.msra.mxu0 0
    %577 = vmatpush.bf16.msra.mxu0 0
    %578 = vmatpush.bf16.msra.mxu0 0
    %579 = vmatpush.bf16.msra.mxu0 0
    %580 = vmatpush.bf16.msra.mxu0 0
    %581 = vmatpush.bf16.msra.mxu0 %v555
    %582 = vmatpush.bf16.msra.mxu0 %v535
    %583 = vmatpush.bf16.msra.mxu0 %v534
    %584 = vmatmul.bf16.gmra.mxu0 %v549
    %v585 = vpop.f32.mrf.mxu0
    %v586 = vadd.f32 %v567, %v585
    %v587 = vpop.f32.mrf.mxu0
    %v588 = vadd.f32 %v569, %v587
    %589 = vmatmul.bf16.gmra.mxu0 %v552
    %v590 = vpop.f32.mrf.mxu0
    %v591 = vadd.f32 %v572, %v590
    %v592 = vpop.f32.mrf.mxu0
    %v593 = vadd.f32 %v574, %v592
    %594 = vdwg.mxu0
    %vm598 = vcmask 1045504
    %v599 = vrot.slane %v586, 2
    %v600 = vrot.slane %v588, 2
    %v601 = vsel %vm598, %v599, %v600
    %v602 = vrot.slane %v591, 2
    %v603 = vsel %vm598, %v600, %v602
    %v607 = vrot.slane %v586, 4
    %v608 = vrot.slane %v588, 4
    %v609 = vsel %vm414, %v607, %v608
    %v610 = vrot.slane %v591, 4
    %v611 = vsel %vm414, %v608, %v610
    %vm616 = vcmask 1041408
    %v617 = vrot.slane %v586, 6
    %v618 = vrot.slane %v588, 6
    %v619 = vsel %vm616, %v617, %v618
    %v620 = vrot.slane %v591, 6
    %v621 = vsel %vm616, %v618, %v620
    %v622 = vrot.slane %v593, 6
    %v623 = vsel %vm616, %v620, %v622
    %v627 = vpack.c.bf16 %v588, %v586
    %v628 = vpack.c.bf16 %v603, %v601
    %v629 = vpack.c.bf16 %v611, %v609
    %v630 = vpack.c.bf16 %v621, %v619
    %v631 = vpack.c.bf16 %v591, %v588
    %v632 = vpack.c.bf16 %v591, %v591
    %v633 = vpack.c.bf16 %v602, %v602
    %v634 = vpack.c.bf16 %v610, %v610
    %v635 = vpack.c.bf16 %v623, %v623
    %v636 = vpack.c.bf16 %v593, %v593
    %v637 = vld [vmem:[%s4] sm:$0xff]
    %v638 = vld [vmem:[%s4 + $0x8] sm:$0xff]
    %v639 = vld [vmem:[%s4 + $0x10] sm:$0xff]
    %v640 = vld [vmem:[%s4 + $0x18] sm:$0xff]
    %v641 = vld [vmem:[%s4 + $0x20] sm:$0xff]
    %v642 = vld [vmem:[%s4 + $0x28] sm:$0xff]
    %v643 = vld [vmem:[%s4 + $0x30] sm:$0xff]
    %v644 = vld [vmem:[%s4 + $0x38] sm:$0xff]
    %v645 = vld [vmem:[%s4 + $0x40] sm:$0xff]
    %v646 = vld [vmem:[%s4 + $0x48] sm:$0xff]
    %v647 = vld [vmem:[%s4 + $0x50] sm:$0xff]
    %v648 = vld [vmem:[%s4 + $0x58] sm:$0xff]
    %v649 = vld [vmem:[%s4 + $0x60] sm:$0xff]
    %v650 = vld [vmem:[%s4 + $0x68] sm:$0xff]
    %v651 = vld [vmem:[%s4 + $0x70] sm:$0xff]
    %v652 = vld [vmem:[%s4 + $0x78] sm:$0xff]
    %v653 = vld [vmem:[%s4 + $0x80] sm:$0xff]
    %v654 = vld [vmem:[%s4 + $0x88] sm:$0xff]
    %v655 = vld [vmem:[%s4 + $0x90] sm:$0xff]
    %v656 = vld [vmem:[%s4 + $0x98] sm:$0xff]
    %v657 = vld [vmem:[%s4 + $0xa0] sm:$0xff]
    %v658 = vld [vmem:[%s4 + $0xa8] sm:$0xff]
    %v659 = vld [vmem:[%s4 + $0xb0] sm:$0xff]
    %v660 = vld [vmem:[%s4 + $0xb8] sm:$0xff]
    %v661 = vld [vmem:[%s4 + $0xc0] sm:$0xff]
    %v662 = vld [vmem:[%s4 + $0xc8] sm:$0xff]
    %v663 = vld [vmem:[%s4 + $0xd0] sm:$0xff]
    %v664 = vld [vmem:[%s4 + $0xd8] sm:$0xff]
    %v665 = vld [vmem:[%s4 + $0xe0] sm:$0xff]
    %v666 = vld [vmem:[%s4 + $0xe8] sm:$0xff]
    %v667 = vld [vmem:[%s4 + $0xf0] sm:$0xff]
    %v668 = vld [vmem:[%s4 + $0xf8] sm:$0xff]
    %v669 = vld [vmem:[%s4 + $0x100] sm:$0xff]
    %v670 = vld [vmem:[%s4 + $0x108] sm:$0xff]
    %v671 = vld [vmem:[%s4 + $0x110] sm:$0xff]
    %v672 = vld [vmem:[%s4 + $0x118] sm:$0xff]
    %v673 = vld [vmem:[%s4 + $0x120] sm:$0xff]
    %v674 = vld [vmem:[%s4 + $0x128] sm:$0xff]
    %v675 = vld [vmem:[%s4 + $0x130] sm:$0xff]
    %v676 = vld [vmem:[%s4 + $0x138] sm:$0xff]
    %v677 = vld [vmem:[%s4 + $0x140] sm:$0xff]
    %v678 = vld [vmem:[%s4 + $0x148] sm:$0xff]
    %v679 = vld [vmem:[%s4 + $0x150] sm:$0xff]
    %v680 = vld [vmem:[%s4 + $0x158] sm:$0xff]
    %v681 = vld [vmem:[%s4 + $0x160] sm:$0xff]
    %v682 = vld [vmem:[%s4 + $0x168] sm:$0xff]
    %v683 = vld [vmem:[%s4 + $0x170] sm:$0xff]
    %v684 = vld [vmem:[%s4 + $0x178] sm:$0xff]
    %v685 = vld [vmem:[%s4 + $0x180] sm:$0xff]
    %v686 = vld [vmem:[%s4 + $0x188] sm:$0xff]
    %v687 = vld [vmem:[%s4 + $0x190] sm:$0xff]
    %v688 = vld [vmem:[%s4 + $0x198] sm:$0xff]
    %v689 = vld [vmem:[%s4 + $0x1a0] sm:$0xff]
    %v690 = vld [vmem:[%s4 + $0x1a8] sm:$0xff]
    %v691 = vld [vmem:[%s4 + $0x1b0] sm:$0xff]
    %v692 = vld [vmem:[%s4 + $0x1b8] sm:$0xff]
    %v693 = vld [vmem:[%s4 + $0x1c0] sm:$0xff]
    %v694 = vld [vmem:[%s4 + $0x1c8] sm:$0xff]
    %v695 = vld [vmem:[%s4 + $0x1d0] sm:$0xff]
    %v696 = vld [vmem:[%s4 + $0x1d8] sm:$0xff]
    %v697 = vld [vmem:[%s4 + $0x1e0] sm:$0xff]
    %v698 = vld [vmem:[%s4 + $0x1e8] sm:$0xff]
    %v699 = vld [vmem:[%s4 + $0x1f0] sm:$0xff]
    %v700 = vld [vmem:[%s4 + $0x1f8] sm:$0xff]
    %v701 = vld [vmem:[%s4 + $0x200] sm:$0xff]
    %v702 = vld [vmem:[%s4 + $0x208] sm:$0xff]
    %v703 = vld [vmem:[%s4 + $0x210] sm:$0xff]
    %v704 = vld [vmem:[%s4 + $0x218] sm:$0xff]
    %v705 = vld [vmem:[%s4 + $0x220] sm:$0xff]
    %v706 = vld [vmem:[%s4 + $0x228] sm:$0xff]
    %v707 = vld [vmem:[%s4 + $0x230] sm:$0xff]
    %v708 = vld [vmem:[%s4 + $0x238] sm:$0xff]
    %v709 = vld [vmem:[%s4 + $0x240] sm:$0xff]
    %v710 = vld [vmem:[%s4 + $0x248] sm:$0xff]
    %v711 = vld [vmem:[%s4 + $0x250] sm:$0xff]
    %v712 = vld [vmem:[%s4 + $0x258] sm:$0xff]
    %v713 = vld [vmem:[%s4 + $0x260] sm:$0xff]
    %v714 = vld [vmem:[%s4 + $0x268] sm:$0xff]
    %v715 = vld [vmem:[%s4 + $0x270] sm:$0xff]
    %v716 = vld [vmem:[%s4 + $0x278] sm:$0xff]
    %v717 = vperm.slane %v40, 1
    %v718 = vperm.slane %v41, 1
    %v799 = vunpack.c.l.b16 %v637
    %v800 = vunpack.c.h.b16 %v637
    %v801 = vunpack.c.l.b16 %v638
    %v802 = vunpack.c.h.b16 %v638
    %v803 = vunpack.c.l.b16 %v639
    %v804 = vunpack.c.h.b16 %v639
    %v805 = vunpack.c.l.b16 %v640
    %v806 = vunpack.c.h.b16 %v640
    %v807 = vunpack.c.l.b16 %v641
    %v808 = vunpack.c.h.b16 %v641
    %v809 = vunpack.c.l.b16 %v642
    %v810 = vunpack.c.h.b16 %v642
    %v811 = vunpack.c.l.b16 %v643
    %v812 = vunpack.c.h.b16 %v643
    %v813 = vunpack.c.l.b16 %v644
    %v814 = vunpack.c.h.b16 %v644
    %v815 = vunpack.c.l.b16 %v645
    %v816 = vunpack.c.h.b16 %v645
    %v817 = vunpack.c.l.b16 %v646
    %v818 = vunpack.c.h.b16 %v646
    %v819 = vunpack.c.l.b16 %v647
    %v820 = vunpack.c.h.b16 %v647
    %v821 = vunpack.c.l.b16 %v648
    %v822 = vunpack.c.h.b16 %v648
    %v823 = vunpack.c.l.b16 %v649
    %v824 = vunpack.c.h.b16 %v649
    %v825 = vunpack.c.l.b16 %v650
    %v826 = vunpack.c.h.b16 %v650
    %v827 = vunpack.c.l.b16 %v651
    %v828 = vunpack.c.h.b16 %v651
    %v829 = vunpack.c.l.b16 %v652
    %v830 = vunpack.c.h.b16 %v652
    %v831 = vunpack.c.l.b16 %v653
    %v832 = vunpack.c.h.b16 %v653
    %v833 = vunpack.c.l.b16 %v654
    %v834 = vunpack.c.h.b16 %v654
    %v835 = vunpack.c.l.b16 %v655
    %v836 = vunpack.c.h.b16 %v655
    %v837 = vunpack.c.l.b16 %v656
    %v838 = vunpack.c.h.b16 %v656
    %v839 = vunpack.c.l.b16 %v657
    %v840 = vunpack.c.h.b16 %v657
    %v841 = vunpack.c.l.b16 %v658
    %v842 = vunpack.c.h.b16 %v658
    %v843 = vunpack.c.l.b16 %v659
    %v844 = vunpack.c.h.b16 %v659
    %v845 = vunpack.c.l.b16 %v660
    %v846 = vunpack.c.h.b16 %v660
    %v847 = vunpack.c.l.b16 %v661
    %v848 = vunpack.c.h.b16 %v661
    %v849 = vunpack.c.l.b16 %v662
    %v850 = vunpack.c.h.b16 %v662
    %v851 = vunpack.c.l.b16 %v663
    %v852 = vunpack.c.h.b16 %v663
    %v853 = vunpack.c.l.b16 %v664
    %v854 = vunpack.c.h.b16 %v664
    %v855 = vunpack.c.l.b16 %v665
    %v856 = vunpack.c.h.b16 %v665
    %v857 = vunpack.c.l.b16 %v666
    %v858 = vunpack.c.h.b16 %v666
    %v859 = vunpack.c.l.b16 %v667
    %v860 = vunpack.c.h.b16 %v667
    %v861 = vunpack.c.l.b16 %v668
    %v862 = vunpack.c.h.b16 %v668
    %v863 = vunpack.c.l.b16 %v669
    %v864 = vunpack.c.h.b16 %v669
    %v865 = vunpack.c.l.b16 %v670
    %v866 = vunpack.c.h.b16 %v670
    %v867 = vunpack.c.l.b16 %v671
    %v868 = vunpack.c.h.b16 %v671
    %v869 = vunpack.c.l.b16 %v672
    %v870 = vunpack.c.h.b16 %v672
    %v871 = vunpack.c.l.b16 %v673
    %v872 = vunpack.c.h.b16 %v673
    %v873 = vunpack.c.l.b16 %v674
    %v874 = vunpack.c.h.b16 %v674
    %v875 = vunpack.c.l.b16 %v675
    %v876 = vunpack.c.h.b16 %v675
    %v877 = vunpack.c.l.b16 %v676
    %v878 = vunpack.c.h.b16 %v676
    %v879 = vunpack.c.l.b16 %v677
    %v880 = vunpack.c.h.b16 %v677
    %v881 = vunpack.c.l.b16 %v678
    %v882 = vunpack.c.h.b16 %v678
    %v883 = vunpack.c.l.b16 %v679
    %v884 = vunpack.c.h.b16 %v679
    %v885 = vunpack.c.l.b16 %v680
    %v886 = vunpack.c.h.b16 %v680
    %v887 = vunpack.c.l.b16 %v681
    %v888 = vunpack.c.h.b16 %v681
    %v889 = vunpack.c.l.b16 %v682
    %v890 = vunpack.c.h.b16 %v682
    %v891 = vunpack.c.l.b16 %v683
    %v892 = vunpack.c.h.b16 %v683
    %v893 = vunpack.c.l.b16 %v684
    %v894 = vunpack.c.h.b16 %v684
    %v895 = vunpack.c.l.b16 %v685
    %v896 = vunpack.c.h.b16 %v685
    %v897 = vunpack.c.l.b16 %v686
    %v898 = vunpack.c.h.b16 %v686
    %v899 = vunpack.c.l.b16 %v687
    %v900 = vunpack.c.h.b16 %v687
    %v901 = vunpack.c.l.b16 %v688
    %v902 = vunpack.c.h.b16 %v688
    %v903 = vunpack.c.l.b16 %v689
    %v904 = vunpack.c.h.b16 %v689
    %v905 = vunpack.c.l.b16 %v690
    %v906 = vunpack.c.h.b16 %v690
    %v907 = vunpack.c.l.b16 %v691
    %v908 = vunpack.c.h.b16 %v691
    %v909 = vunpack.c.l.b16 %v692
    %v910 = vunpack.c.h.b16 %v692
    %v911 = vunpack.c.l.b16 %v693
    %v912 = vunpack.c.h.b16 %v693
    %v913 = vunpack.c.l.b16 %v694
    %v914 = vunpack.c.h.b16 %v694
    %v915 = vunpack.c.l.b16 %v695
    %v916 = vunpack.c.h.b16 %v695
    %v917 = vunpack.c.l.b16 %v696
    %v918 = vunpack.c.h.b16 %v696
    %v919 = vunpack.c.l.b16 %v697
    %v920 = vunpack.c.h.b16 %v697
    %v921 = vunpack.c.l.b16 %v698
    %v922 = vunpack.c.h.b16 %v698
    %v923 = vunpack.c.l.b16 %v699
    %v924 = vunpack.c.h.b16 %v699
    %v925 = vunpack.c.l.b16 %v700
    %v926 = vunpack.c.h.b16 %v700
    %v927 = vunpack.c.l.b16 %v701
    %v928 = vunpack.c.h.b16 %v701
    %v929 = vunpack.c.l.b16 %v702
    %v930 = vunpack.c.h.b16 %v702
    %v931 = vunpack.c.l.b16 %v703
    %v932 = vunpack.c.h.b16 %v703
    %v933 = vunpack.c.l.b16 %v704
    %v934 = vunpack.c.h.b16 %v704
    %v935 = vunpack.c.l.b16 %v705
    %v936 = vunpack.c.h.b16 %v705
    %v937 = vunpack.c.l.b16 %v706
    %v938 = vunpack.c.h.b16 %v706
    %v939 = vunpack.c.l.b16 %v707
    %v940 = vunpack.c.h.b16 %v707
    %v941 = vunpack.c.l.b16 %v708
    %v942 = vunpack.c.h.b16 %v708
    %v943 = vunpack.c.l.b16 %v709
    %v944 = vunpack.c.h.b16 %v709
    %v945 = vunpack.c.l.b16 %v710
    %v946 = vunpack.c.h.b16 %v710
    %v947 = vunpack.c.l.b16 %v711
    %v948 = vunpack.c.h.b16 %v711
    %v949 = vunpack.c.l.b16 %v712
    %v950 = vunpack.c.h.b16 %v712
    %v951 = vunpack.c.l.b16 %v713
    %v952 = vunpack.c.h.b16 %v713
    %v953 = vunpack.c.l.b16 %v714
    %v954 = vunpack.c.h.b16 %v714
    %v955 = vunpack.c.l.b16 %v715
    %v956 = vunpack.c.h.b16 %v715
    %v957 = vunpack.c.l.b16 %v716
    %v958 = vunpack.c.h.b16 %v716
    %v959 = vpack.c.b16 %v801, %v799
    %v960 = vpack.c.b16 %v802, %v800
    %v961 = vpack.c.b16 %v805, %v803
    %v962 = vpack.c.b16 %v806, %v804
    %v963 = vpack.c.b16 %v809, %v807
    %v964 = vpack.c.b16 %v810, %v808
    %v965 = vpack.c.b16 %v813, %v811
    %v966 = vpack.c.b16 %v814, %v812
    %v967 = vpack.c.b16 %v817, %v815
    %v968 = vpack.c.b16 %v818, %v816
    %v969 = vpack.c.b16 %v821, %v819
    %v970 = vpack.c.b16 %v822, %v820
    %v971 = vpack.c.b16 %v825, %v823
    %v972 = vpack.c.b16 %v826, %v824
    %v973 = vpack.c.b16 %v829, %v827
    %v974 = vpack.c.b16 %v830, %v828
    %v975 = vpack.c.b16 %v833, %v831
    %v976 = vpack.c.b16 %v834, %v832
    %v977 = vpack.c.b16 %v837, %v835
    %v978 = vpack.c.b16 %v838, %v836
    %v979 = vpack.c.b16 %v841, %v839
    %v980 = vpack.c.b16 %v842, %v840
    %v981 = vpack.c.b16 %v845, %v843
    %v982 = vpack.c.b16 %v846, %v844
    %v983 = vpack.c.b16 %v849, %v847
    %v984 = vpack.c.b16 %v850, %v848
    %v985 = vpack.c.b16 %v853, %v851
    %v986 = vpack.c.b16 %v854, %v852
    %v987 = vpack.c.b16 %v857, %v855
    %v988 = vpack.c.b16 %v858, %v856
    %v989 = vpack.c.b16 %v861, %v859
    %v990 = vpack.c.b16 %v862, %v860
    %v991 = vpack.c.b16 %v865, %v863
    %v992 = vpack.c.b16 %v866, %v864
    %v993 = vpack.c.b16 %v869, %v867
    %v994 = vpack.c.b16 %v870, %v868
    %v995 = vpack.c.b16 %v873, %v871
    %v996 = vpack.c.b16 %v874, %v872
    %v997 = vpack.c.b16 %v877, %v875
    %v998 = vpack.c.b16 %v878, %v876
    %v999 = vpack.c.b16 %v881, %v879
    %v1000 = vpack.c.b16 %v882, %v880
    %v1001 = vpack.c.b16 %v885, %v883
    %v1002 = vpack.c.b16 %v886, %v884
    %v1003 = vpack.c.b16 %v889, %v887
    %v1004 = vpack.c.b16 %v890, %v888
    %v1005 = vpack.c.b16 %v893, %v891
    %v1006 = vpack.c.b16 %v894, %v892
    %v1007 = vpack.c.b16 %v897, %v895
    %v1008 = vpack.c.b16 %v898, %v896
    %v1009 = vpack.c.b16 %v901, %v899
    %v1010 = vpack.c.b16 %v902, %v900
    %v1011 = vpack.c.b16 %v905, %v903
    %v1012 = vpack.c.b16 %v906, %v904
    %v1013 = vpack.c.b16 %v909, %v907
    %v1014 = vpack.c.b16 %v910, %v908
    %v1015 = vpack.c.b16 %v913, %v911
    %v1016 = vpack.c.b16 %v914, %v912
    %v1017 = vpack.c.b16 %v917, %v915
    %v1018 = vpack.c.b16 %v918, %v916
    %v1019 = vpack.c.b16 %v921, %v919
    %v1020 = vpack.c.b16 %v922, %v920
    %v1021 = vpack.c.b16 %v925, %v923
    %v1022 = vpack.c.b16 %v926, %v924
    %v1023 = vpack.c.b16 %v929, %v927
    %v1024 = vpack.c.b16 %v930, %v928
    %v1025 = vpack.c.b16 %v933, %v931
    %v1026 = vpack.c.b16 %v934, %v932
    %v1027 = vpack.c.b16 %v937, %v935
    %v1028 = vpack.c.b16 %v938, %v936
    %v1029 = vpack.c.b16 %v941, %v939
    %v1030 = vpack.c.b16 %v942, %v940
    %v1031 = vpack.c.b16 %v945, %v943
    %v1032 = vpack.c.b16 %v946, %v944
    %v1033 = vpack.c.b16 %v949, %v947
    %v1034 = vpack.c.b16 %v950, %v948
    %v1035 = vpack.c.b16 %v953, %v951
    %v1036 = vpack.c.b16 %v954, %v952
    %v1037 = vpack.c.b16 %v957, %v955
    %v1038 = vpack.c.b16 %v958, %v956
    %1119 = vmatpush.bf16.msra.mxu0 %v973
    %1120 = vmatpush.bf16.msra.mxu0 %v971
    %1121 = vmatpush.bf16.msra.mxu0 %v969
    %1122 = vmatpush.bf16.msra.mxu0 %v967
    %1123 = vmatpush.bf16.msra.mxu0 %v965
    %1124 = vmatpush.bf16.msra.mxu0 %v963
    %1125 = vmatpush.bf16.msra.mxu0 %v961
    %1126 = vmatpush.bf16.msra.mxu0 %v959
    %1127 = vmatmul.bf16.gmra.mxu0 %v627
    %v1128 = vpop.f32.mrf.mxu0
    %v1129 = vadd.f32 %v717, %v1128
    %v1130 = vpop.f32.mrf.mxu0
    %v1131 = vadd.f32 %v717, %v1130
    %1132 = vmatmul.bf16.gmra.mxu0 %v632
    %v1133 = vpop.f32.mrf.mxu0
    %v1134 = vadd.f32 %v717, %v1133
    %v1135 = vpop.f32.mrf.mxu0
    %1136 = vdwg.mxu0
    %1137 = vmatpush.bf16.msra.mxu0 %v989
    %1138 = vmatpush.bf16.msra.mxu0 %v987
    %1139 = vmatpush.bf16.msra.mxu0 %v985
    %1140 = vmatpush.bf16.msra.mxu0 %v983
    %1141 = vmatpush.bf16.msra.mxu0 %v981
    %1142 = vmatpush.bf16.msra.mxu0 %v979
    %1143 = vmatpush.bf16.msra.mxu0 %v977
    %1144 = vmatpush.bf16.msra.mxu0 %v975
    %1145 = vmatmul.bf16.gmra.mxu0 %v628
    %v1146 = vpop.f32.mrf.mxu0
    %v1147 = vadd.f32 %v1129, %v1146
    %v1148 = vpop.f32.mrf.mxu0
    %v1149 = vadd.f32 %v1131, %v1148
    %1150 = vmatmul.bf16.gmra.mxu0 %v633
    %v1151 = vpop.f32.mrf.mxu0
    %v1152 = vadd.f32 %v1134, %v1151
    %v1153 = vpop.f32.mrf.mxu0
    %1154 = vdwg.mxu0
    %1155 = vmatpush.bf16.msra.mxu0 %v1005
    %1156 = vmatpush.bf16.msra.mxu0 %v1003
    %1157 = vmatpush.bf16.msra.mxu0 %v1001
    %1158 = vmatpush.bf16.msra.mxu0 %v999
    %1159 = vmatpush.bf16.msra.mxu0 %v997
    %1160 = vmatpush.bf16.msra.mxu0 %v995
    %1161 = vmatpush.bf16.msra.mxu0 %v993
    %1162 = vmatpush.bf16.msra.mxu0 %v991
    %1163 = vmatmul.bf16.gmra.mxu0 %v629
    %v1164 = vpop.f32.mrf.mxu0
    %v1165 = vadd.f32 %v1147, %v1164
    %v1166 = vpop.f32.mrf.mxu0
    %v1167 = vadd.f32 %v1149, %v1166
    %1168 = vmatmul.bf16.gmra.mxu0 %v634
    %v1169 = vpop.f32.mrf.mxu0
    %v1170 = vadd.f32 %v1152, %v1169
    %v1171 = vpop.f32.mrf.mxu0
    %1172 = vdwg.mxu0
    %1173 = vmatpush.bf16.msra.mxu0 %v1021
    %1174 = vmatpush.bf16.msra.mxu0 %v1019
    %1175 = vmatpush.bf16.msra.mxu0 %v1017
    %1176 = vmatpush.bf16.msra.mxu0 %v1015
    %1177 = vmatpush.bf16.msra.mxu0 %v1013
    %1178 = vmatpush.bf16.msra.mxu0 %v1011
    %1179 = vmatpush.bf16.msra.mxu0 %v1009
    %1180 = vmatpush.bf16.msra.mxu0 %v1007
    %1181 = vmatmul.bf16.gmra.mxu0 %v630
    %v1182 = vpop.f32.mrf.mxu0
    %v1183 = vadd.f32 %v1165, %v1182
    %v1184 = vpop.f32.mrf.mxu0
    %v1185 = vadd.f32 %v1167, %v1184
    %1186 = vmatmul.bf16.gmra.mxu0 %v635
    %v1187 = vpop.f32.mrf.mxu0
    %v1188 = vadd.f32 %v1170, %v1187
    %v1189 = vpop.f32.mrf.mxu0
    %1190 = vdwg.mxu0
    %1191 = vmatpush.bf16.msra.mxu0 %v1037
    %1192 = vmatpush.bf16.msra.mxu0 %v1035
    %1193 = vmatpush.bf16.msra.mxu0 %v1033
    %1194 = vmatpush.bf16.msra.mxu0 %v1031
    %1195 = vmatpush.bf16.msra.mxu0 %v1029
    %1196 = vmatpush.bf16.msra.mxu0 %v1027
    %1197 = vmatpush.bf16.msra.mxu0 %v1025
    %1198 = vmatpush.bf16.msra.mxu0 %v1023
    %1199 = vmatmul.bf16.gmra.mxu0 %v631
    %v1200 = vpop.f32.mrf.mxu0
    %v1201 = vadd.f32 %v1183, %v1200
    %v1202 = vpop.f32.mrf.mxu0
    %v1203 = vadd.f32 %v1185, %v1202
    %1204 = vmatmul.bf16.gmra.mxu0 %v636
    %v1205 = vpop.f32.mrf.mxu0
    %v1206 = vadd.f32 %v1188, %v1205
    %v1207 = vpop.f32.mrf.mxu0
    %1208 = vdwg.mxu0
    %1209 = vmatpush.bf16.msra.mxu0 %v974
    %1210 = vmatpush.bf16.msra.mxu0 %v972
    %1211 = vmatpush.bf16.msra.mxu0 %v970
    %1212 = vmatpush.bf16.msra.mxu0 %v968
    %1213 = vmatpush.bf16.msra.mxu0 %v966
    %1214 = vmatpush.bf16.msra.mxu0 %v964
    %1215 = vmatpush.bf16.msra.mxu0 %v962
    %1216 = vmatpush.bf16.msra.mxu0 %v960
    %1217 = vmatmul.bf16.gmra.mxu0 %v627
    %v1218 = vpop.f32.mrf.mxu0
    %v1219 = vadd.f32 %v718, %v1218
    %v1220 = vpop.f32.mrf.mxu0
    %v1221 = vadd.f32 %v718, %v1220
    %1222 = vmatmul.bf16.gmra.mxu0 %v632
    %v1223 = vpop.f32.mrf.mxu0
    %v1224 = vadd.f32 %v718, %v1223
    %v1225 = vpop.f32.mrf.mxu0
    %1226 = vdwg.mxu0
    %1227 = vmatpush.bf16.msra.mxu0 %v990
    %1228 = vmatpush.bf16.msra.mxu0 %v988
    %1229 = vmatpush.bf16.msra.mxu0 %v986
    %1230 = vmatpush.bf16.msra.mxu0 %v984
    %1231 = vmatpush.bf16.msra.mxu0 %v982
    %1232 = vmatpush.bf16.msra.mxu0 %v980
    %1233 = vmatpush.bf16.msra.mxu0 %v978
    %1234 = vmatpush.bf16.msra.mxu0 %v976
    %1235 = vmatmul.bf16.gmra.mxu0 %v628
    %v1236 = vpop.f32.mrf.mxu0
    %v1237 = vadd.f32 %v1219, %v1236
    %v1238 = vpop.f32.mrf.mxu0
    %v1239 = vadd.f32 %v1221, %v1238
    %1240 = vmatmul.bf16.gmra.mxu0 %v633
    %v1241 = vpop.f32.mrf.mxu0
    %v1242 = vadd.f32 %v1224, %v1241
    %v1243 = vpop.f32.mrf.mxu0
    %1244 = vdwg.mxu0
    %1245 = vmatpush.bf16.msra.mxu0 %v1006
    %1246 = vmatpush.bf16.msra.mxu0 %v1004
    %1247 = vmatpush.bf16.msra.mxu0 %v1002
    %1248 = vmatpush.bf16.msra.mxu0 %v1000
    %1249 = vmatpush.bf16.msra.mxu0 %v998
    %1250 = vmatpush.bf16.msra.mxu0 %v996
    %1251 = vmatpush.bf16.msra.mxu0 %v994
    %1252 = vmatpush.bf16.msra.mxu0 %v992
    %1253 = vmatmul.bf16.gmra.mxu0 %v629
    %v1254 = vpop.f32.mrf.mxu0
    %v1255 = vadd.f32 %v1237, %v1254
    %v1256 = vpop.f32.mrf.mxu0
    %v1257 = vadd.f32 %v1239, %v1256
    %1258 = vmatmul.bf16.gmra.mxu0 %v634
    %v1259 = vpop.f32.mrf.mxu0
    %v1260 = vadd.f32 %v1242, %v1259
    %v1261 = vpop.f32.mrf.mxu0
    %1262 = vdwg.mxu0
    %1263 = vmatpush.bf16.msra.mxu0 %v1022
    %1264 = vmatpush.bf16.msra.mxu0 %v1020
    %1265 = vmatpush.bf16.msra.mxu0 %v1018
    %1266 = vmatpush.bf16.msra.mxu0 %v1016
    %1267 = vmatpush.bf16.msra.mxu0 %v1014
    %1268 = vmatpush.bf16.msra.mxu0 %v1012
    %1269 = vmatpush.bf16.msra.mxu0 %v1010
    %1270 = vmatpush.bf16.msra.mxu0 %v1008
    %1271 = vmatmul.bf16.gmra.mxu0 %v630
    %v1272 = vpop.f32.mrf.mxu0
    %v1273 = vadd.f32 %v1255, %v1272
    %v1274 = vpop.f32.mrf.mxu0
    %v1275 = vadd.f32 %v1257, %v1274
    %1276 = vmatmul.bf16.gmra.mxu0 %v635
    %v1277 = vpop.f32.mrf.mxu0
    %v1278 = vadd.f32 %v1260, %v1277
    %v1279 = vpop.f32.mrf.mxu0
    %1280 = vdwg.mxu0
    %1281 = vmatpush.bf16.msra.mxu0 %v1038
    %1282 = vmatpush.bf16.msra.mxu0 %v1036
    %1283 = vmatpush.bf16.msra.mxu0 %v1034
    %1284 = vmatpush.bf16.msra.mxu0 %v1032
    %1285 = vmatpush.bf16.msra.mxu0 %v1030
    %1286 = vmatpush.bf16.msra.mxu0 %v1028
    %1287 = vmatpush.bf16.msra.mxu0 %v1026
    %1288 = vmatpush.bf16.msra.mxu0 %v1024
    %1289 = vmatmul.bf16.gmra.mxu0 %v631
    %v1290 = vpop.f32.mrf.mxu0
    %v1291 = vadd.f32 %v1273, %v1290
    %v1292 = vpop.f32.mrf.mxu0
    %v1293 = vadd.f32 %v1275, %v1292
    %1294 = vmatmul.bf16.gmra.mxu0 %v636
    %v1295 = vpop.f32.mrf.mxu0
    %v1296 = vadd.f32 %v1278, %v1295
    %v1297 = vpop.f32.mrf.mxu0
    %1298 = vdwg.mxu0
    %v1299 = vmul.f32 %v1201, 0.5
    %v1300 = vmul.f32 %v1291, 0.5
    %v1301 = vmul.f32 %v1203, 0.5
    %v1302 = vmul.f32 %v1293, 0.5
    %v1303 = vmul.f32 %v1206, 0.5
    %v1304 = vmul.f32 %v1296, 0.5
    %v1305 = vtanh.pop %v1299
    %v1306 = vtanh.pop %v1300
    %v1307 = vtanh.pop %v1301
    %v1308 = vtanh.pop %v1302
    %v1309 = vtanh.pop %v1303
    %v1310 = vtanh.pop %v1304
    %v1311 = vmul.f32 %v1305, 0.5
    %v1312 = vmul.f32 %v1306, 0.5
    %v1313 = vmul.f32 %v1307, 0.5
    %v1314 = vmul.f32 %v1308, 0.5
    %v1315 = vmul.f32 %v1309, 0.5
    %v1316 = vmul.f32 %v1310, 0.5
    %v1317 = vadd.f32 %v1311, 0.5
    %v1318 = vadd.f32 %v1312, 0.5
    %v1319 = vadd.f32 %v1313, 0.5
    %v1320 = vadd.f32 %v1314, 0.5
    %v1321 = vadd.f32 %v1315, 0.5
    %v1322 = vadd.f32 %v1316, 0.5
    %v1323 = vld [vmem:[%s5] sm:$0xf]
    %v1324 = vld [vmem:[%s5 + $0x4] sm:$0x1]
    %v1325 = vpack.c.bf16 %v1319, %v1317
    %v1326 = vpack.c.bf16 %v1320, %v1318
    %v1327 = vpack.c.bf16 %v1321, %v1321
    %v1328 = vpack.c.bf16 %v1322, %v1322
    %v1331 = vunpack.c.l.b16 %v1323
    %v1332 = vunpack.c.l.b16 %v1324
    %v1333 = vpack.c.b16 %v1332, %v1331
    %vm1334 = vcmask 162816
    %v1336 = vsel %vm1334, %v1333, 0
    %v1339 = vsel %vm616, %v1327, 0
    %v1342 = vsel %vm616, %v1328, 0
    %1344 = vmatpush.bf16.msra.mxu0 0
    %1345 = vmatpush.bf16.msra.mxu0 0
    %1346 = vmatpush.bf16.msra.mxu0 0
    %1347 = vmatpush.bf16.msra.mxu0 0
    %1348 = vmatpush.bf16.msra.mxu0 0
    %1349 = vmatpush.bf16.msra.mxu0 0
    %1350 = vmatpush.bf16.msra.mxu0 %v1339
    %1351 = vmatpush.bf16.msra.mxu0 %v1325
    %1352 = vmatmul.bf16.gmra.mxu0 %v1336
    %v1353 = vpop.f32.mrf.mxu0
    %v1354 = vadd.f32 0.0, %v1353
    %v1355 = vpop.f32.mrf.mxu0
    %v1356 = vadd.f32 0.0, %v1355
    %1357 = vdwg.mxu0
    %1358 = vmatpush.bf16.msra.mxu0 0
    %1359 = vmatpush.bf16.msra.mxu0 0
    %1360 = vmatpush.bf16.msra.mxu0 0
    %1361 = vmatpush.bf16.msra.mxu0 0
    %1362 = vmatpush.bf16.msra.mxu0 0
    %1363 = vmatpush.bf16.msra.mxu0 0
    %1364 = vmatpush.bf16.msra.mxu0 %v1342
    %1365 = vmatpush.bf16.msra.mxu0 %v1326
    %1366 = vmatmul.bf16.gmra.mxu0 %v1336
    %v1367 = vpop.f32.mrf.mxu0
    %v1368 = vadd.f32 0.0, %v1367
    %v1369 = vpop.f32.mrf.mxu0
    %v1370 = vadd.f32 0.0, %v1369
    %1371 = vdwg.mxu0
    %v1372 = vpack.c.bf16 %v1356, %v1354
    %v1373 = vpack.c.bf16 %v1370, %v1368
    %v1374 = vld [vmem:[%s6] sm:$0xf]
    %v1375 = vld [vmem:[%s6 + $0x4] sm:$0xf]
    %v1376 = vld [vmem:[%s6 + $0x8] sm:$0xf]
    %v1377 = vld [vmem:[%s6 + $0xc] sm:$0xf]
    %v1378 = vld [vmem:[%s6 + $0x10] sm:$0xf]
    %v1379 = vld [vmem:[%s6 + $0x14] sm:$0xf]
    %v1380 = vld [vmem:[%s6 + $0x18] sm:$0xf]
    %v1381 = vld [vmem:[%s6 + $0x1c] sm:$0xf]
    %v1382 = vld [vmem:[%s6 + $0x20] sm:$0xf]
    %v1383 = vld [vmem:[%s6 + $0x24] sm:$0xf]
    %v1384 = vld [vmem:[%s6 + $0x28] sm:$0xf]
    %v1385 = vld [vmem:[%s6 + $0x2c] sm:$0xf]
    %v1386 = vld [vmem:[%s6 + $0x30] sm:$0xf]
    %v1387 = vld [vmem:[%s6 + $0x34] sm:$0xf]
    %v1388 = vld [vmem:[%s6 + $0x38] sm:$0xf]
    %v1389 = vld [vmem:[%s6 + $0x3c] sm:$0xf]
    %v1390 = vld [vmem:[%s6 + $0x40] sm:$0xf]
    %v1391 = vld [vmem:[%s6 + $0x44] sm:$0xf]
    %v1392 = vld [vmem:[%s6 + $0x48] sm:$0xf]
    %v1393 = vld [vmem:[%s6 + $0x4c] sm:$0xf]
    %v1414 = vunpack.c.l.b16 %v1374
    %v1415 = vunpack.c.l.b16 %v1375
    %v1416 = vunpack.c.l.b16 %v1376
    %v1417 = vunpack.c.l.b16 %v1377
    %v1418 = vunpack.c.l.b16 %v1378
    %v1419 = vunpack.c.l.b16 %v1379
    %v1420 = vunpack.c.l.b16 %v1380
    %v1421 = vunpack.c.l.b16 %v1381
    %v1422 = vunpack.c.l.b16 %v1382
    %v1423 = vunpack.c.l.b16 %v1383
    %v1424 = vunpack.c.l.b16 %v1384
    %v1425 = vunpack.c.l.b16 %v1385
    %v1426 = vunpack.c.l.b16 %v1386
    %v1427 = vunpack.c.l.b16 %v1387
    %v1428 = vunpack.c.l.b16 %v1388
    %v1429 = vunpack.c.l.b16 %v1389
    %v1430 = vunpack.c.l.b16 %v1390
    %v1431 = vunpack.c.l.b16 %v1391
    %v1432 = vunpack.c.l.b16 %v1392
    %v1433 = vunpack.c.l.b16 %v1393
    %v1434 = vpack.c.b16 %v1415, %v1414
    %v1435 = vpack.c.b16 %v1417, %v1416
    %v1436 = vpack.c.b16 %v1419, %v1418
    %v1437 = vpack.c.b16 %v1421, %v1420
    %v1438 = vpack.c.b16 %v1423, %v1422
    %v1439 = vpack.c.b16 %v1425, %v1424
    %v1440 = vpack.c.b16 %v1427, %v1426
    %v1441 = vpack.c.b16 %v1429, %v1428
    %v1442 = vpack.c.b16 %v1431, %v1430
    %v1443 = vpack.c.b16 %v1433, %v1432
    %v1455 = vsel %vm204, %v1373, 0
    %1457 = vmatpush.bf16.msra.mxu0 %v1441
    %1458 = vmatpush.bf16.msra.mxu0 %v1440
    %1459 = vmatpush.bf16.msra.mxu0 %v1439
    %1460 = vmatpush.bf16.msra.mxu0 %v1438
    %1461 = vmatpush.bf16.msra.mxu0 %v1437
    %1462 = vmatpush.bf16.msra.mxu0 %v1436
    %1463 = vmatpush.bf16.msra.mxu0 %v1435
    %1464 = vmatpush.bf16.msra.mxu0 %v1434
    %1465 = vmatmul.bf16.gmra.mxu0 %v1372
    %v1466 = vpop.f32.mrf.mxu0
    %v1467 = vadd.f32 0.0, %v1466
    %v1468 = vpop.f32.mrf.mxu0
    %v1469 = vadd.f32 0.0, %v1468
    %1470 = vdwg.mxu0
    %1471 = vmatpush.bf16.msra.mxu0 0
    %1472 = vmatpush.bf16.msra.mxu0 0
    %1473 = vmatpush.bf16.msra.mxu0 0
    %1474 = vmatpush.bf16.msra.mxu0 0
    %1475 = vmatpush.bf16.msra.mxu0 0
    %1476 = vmatpush.bf16.msra.mxu0 0
    %1477 = vmatpush.bf16.msra.mxu0 %v1443
    %1478 = vmatpush.bf16.msra.mxu0 %v1442
    %1479 = vmatmul.bf16.gmra.mxu0 %v1455
    %v1480 = vpop.f32.mrf.mxu0
    %v1481 = vadd.f32 %v1467, %v1480
    %v1482 = vpop.f32.mrf.mxu0
    %v1483 = vadd.f32 %v1469, %v1482
    %1484 = vdwg.mxu0
    %v1486 = vrot.slane %v1481, 2
    %v1488 = vrot.slane %v1481, 4
    %v1490 = vrot.slane %v1481, 6
    %v1492 = vpack.c.bf16 %v1481, %v1481
    %v1493 = vpack.c.bf16 %v1486, %v1486
    %v1494 = vpack.c.bf16 %v1488, %v1488
    %v1495 = vpack.c.bf16 %v1490, %v1490
    %v1496 = vpack.c.bf16 %v1483, %v1483
    %v1497 = vld [vmem:[%s7] sm:$0xf]
    %v1498 = vld [vmem:[%s7 + $0x4] sm:$0xf]
    %v1499 = vld [vmem:[%s7 + $0x8] sm:$0xf]
    %v1500 = vld [vmem:[%s7 + $0xc] sm:$0xf]
    %v1501 = vld [vmem:[%s7 + $0x10] sm:$0xf]
    %v1502 = vld [vmem:[%s7 + $0x14] sm:$0xf]
    %v1503 = vld [vmem:[%s7 + $0x18] sm:$0xf]
    %v1504 = vld [vmem:[%s7 + $0x1c] sm:$0xf]
    %v1505 = vld [vmem:[%s7 + $0x20] sm:$0xf]
    %v1506 = vld [vmem:[%s7 + $0x24] sm:$0xf]
    %v1507 = vld [vmem:[%s7 + $0x28] sm:$0xf]
    %v1508 = vld [vmem:[%s7 + $0x2c] sm:$0xf]
    %v1509 = vld [vmem:[%s7 + $0x30] sm:$0xf]
    %v1510 = vld [vmem:[%s7 + $0x34] sm:$0xf]
    %v1511 = vld [vmem:[%s7 + $0x38] sm:$0xf]
    %v1512 = vld [vmem:[%s7 + $0x3c] sm:$0xf]
    %v1513 = vld [vmem:[%s7 + $0x40] sm:$0xf]
    %v1514 = vld [vmem:[%s7 + $0x44] sm:$0xf]
    %v1515 = vld [vmem:[%s7 + $0x48] sm:$0xf]
    %v1516 = vld [vmem:[%s7 + $0x4c] sm:$0xf]
    %v1517 = vld [vmem:[%s7 + $0x50] sm:$0xf]
    %v1518 = vld [vmem:[%s7 + $0x54] sm:$0xf]
    %v1519 = vld [vmem:[%s7 + $0x58] sm:$0xf]
    %v1520 = vld [vmem:[%s7 + $0x5c] sm:$0xf]
    %v1521 = vld [vmem:[%s7 + $0x60] sm:$0xf]
    %v1522 = vld [vmem:[%s7 + $0x64] sm:$0xf]
    %v1523 = vld [vmem:[%s7 + $0x68] sm:$0xf]
    %v1524 = vld [vmem:[%s7 + $0x6c] sm:$0xf]
    %v1525 = vld [vmem:[%s7 + $0x70] sm:$0xf]
    %v1526 = vld [vmem:[%s7 + $0x74] sm:$0xf]
    %v1527 = vld [vmem:[%s7 + $0x78] sm:$0xf]
    %v1528 = vld [vmem:[%s7 + $0x7c] sm:$0xf]
    %v1529 = vld [vmem:[%s7 + $0x80] sm:$0xf]
    %v1530 = vld [vmem:[%s7 + $0x84] sm:$0xf]
    %v1531 = vld [vmem:[%s7 + $0x88] sm:$0xf]
    %v1532 = vld [vmem:[%s7 + $0x8c] sm:$0xf]
    %v1533 = vld [vmem:[%s7 + $0x90] sm:$0xf]
    %v1534 = vld [vmem:[%s7 + $0x94] sm:$0xf]
    %v1535 = vld [vmem:[%s7 + $0x98] sm:$0xf]
    %v1536 = vld [vmem:[%s7 + $0x9c] sm:$0xf]
    %v1537 = vld [vmem:[%s7 + $0xa0] sm:$0xf]
    %v1538 = vld [vmem:[%s7 + $0xa4] sm:$0xf]
    %v1539 = vld [vmem:[%s7 + $0xa8] sm:$0xf]
    %v1540 = vld [vmem:[%s7 + $0xac] sm:$0xf]
    %v1541 = vld [vmem:[%s7 + $0xb0] sm:$0xf]
    %v1542 = vld [vmem:[%s7 + $0xb4] sm:$0xf]
    %v1543 = vld [vmem:[%s7 + $0xb8] sm:$0xf]
    %v1544 = vld [vmem:[%s7 + $0xbc] sm:$0xf]
    %v1545 = vld [vmem:[%s7 + $0xc0] sm:$0xf]
    %v1546 = vld [vmem:[%s7 + $0xc4] sm:$0xf]
    %v1547 = vld [vmem:[%s7 + $0xc8] sm:$0xf]
    %v1548 = vld [vmem:[%s7 + $0xcc] sm:$0xf]
    %v1549 = vld [vmem:[%s7 + $0xd0] sm:$0xf]
    %v1550 = vld [vmem:[%s7 + $0xd4] sm:$0xf]
    %v1551 = vld [vmem:[%s7 + $0xd8] sm:$0xf]
    %v1552 = vld [vmem:[%s7 + $0xdc] sm:$0xf]
    %v1553 = vld [vmem:[%s7 + $0xe0] sm:$0xf]
    %v1554 = vld [vmem:[%s7 + $0xe4] sm:$0xf]
    %v1555 = vld [vmem:[%s7 + $0xe8] sm:$0xf]
    %v1556 = vld [vmem:[%s7 + $0xec] sm:$0xf]
    %v1557 = vld [vmem:[%s7 + $0xf0] sm:$0xf]
    %v1558 = vld [vmem:[%s7 + $0xf4] sm:$0xf]
    %v1559 = vld [vmem:[%s7 + $0xf8] sm:$0xf]
    %v1560 = vld [vmem:[%s7 + $0xfc] sm:$0xf]
    %v1561 = vld [vmem:[%s7 + $0x100] sm:$0xf]
    %v1562 = vld [vmem:[%s7 + $0x104] sm:$0xf]
    %v1563 = vld [vmem:[%s7 + $0x108] sm:$0xf]
    %v1564 = vld [vmem:[%s7 + $0x10c] sm:$0xf]
    %v1565 = vld [vmem:[%s7 + $0x110] sm:$0xf]
    %v1566 = vld [vmem:[%s7 + $0x114] sm:$0xf]
    %v1567 = vld [vmem:[%s7 + $0x118] sm:$0xf]
    %v1568 = vld [vmem:[%s7 + $0x11c] sm:$0xf]
    %v1569 = vld [vmem:[%s7 + $0x120] sm:$0xf]
    %v1570 = vld [vmem:[%s7 + $0x124] sm:$0xf]
    %v1571 = vld [vmem:[%s7 + $0x128] sm:$0xf]
    %v1572 = vld [vmem:[%s7 + $0x12c] sm:$0xf]
    %v1573 = vld [vmem:[%s7 + $0x130] sm:$0xf]
    %v1574 = vld [vmem:[%s7 + $0x134] sm:$0xf]
    %v1575 = vld [vmem:[%s7 + $0x138] sm:$0xf]
    %v1576 = vld [vmem:[%s7 + $0x13c] sm:$0xf]
    %v1577 = vperm.slane %v40, 2
    %v1658 = vunpack.c.l.b16 %v1497
    %v1659 = vunpack.c.l.b16 %v1498
    %v1660 = vunpack.c.l.b16 %v1499
    %v1661 = vunpack.c.l.b16 %v1500
    %v1662 = vunpack.c.l.b16 %v1501
    %v1663 = vunpack.c.l.b16 %v1502
    %v1664 = vunpack.c.l.b16 %v1503
    %v1665 = vunpack.c.l.b16 %v1504
    %v1666 = vunpack.c.l.b16 %v1505
    %v1667 = vunpack.c.l.b16 %v1506
    %v1668 = vunpack.c.l.b16 %v1507
    %v1669 = vunpack.c.l.b16 %v1508
    %v1670 = vunpack.c.l.b16 %v1509
    %v1671 = vunpack.c.l.b16 %v1510
    %v1672 = vunpack.c.l.b16 %v1511
    %v1673 = vunpack.c.l.b16 %v1512
    %v1674 = vunpack.c.l.b16 %v1513
    %v1675 = vunpack.c.l.b16 %v1514
    %v1676 = vunpack.c.l.b16 %v1515
    %v1677 = vunpack.c.l.b16 %v1516
    %v1678 = vunpack.c.l.b16 %v1517
    %v1679 = vunpack.c.l.b16 %v1518
    %v1680 = vunpack.c.l.b16 %v1519
    %v1681 = vunpack.c.l.b16 %v1520
    %v1682 = vunpack.c.l.b16 %v1521
    %v1683 = vunpack.c.l.b16 %v1522
    %v1684 = vunpack.c.l.b16 %v1523
    %v1685 = vunpack.c.l.b16 %v1524
    %v1686 = vunpack.c.l.b16 %v1525
    %v1687 = vunpack.c.l.b16 %v1526
    %v1688 = vunpack.c.l.b16 %v1527
    %v1689 = vunpack.c.l.b16 %v1528
    %v1690 = vunpack.c.l.b16 %v1529
    %v1691 = vunpack.c.l.b16 %v1530
    %v1692 = vunpack.c.l.b16 %v1531
    %v1693 = vunpack.c.l.b16 %v1532
    %v1694 = vunpack.c.l.b16 %v1533
    %v1695 = vunpack.c.l.b16 %v1534
    %v1696 = vunpack.c.l.b16 %v1535
    %v1697 = vunpack.c.l.b16 %v1536
    %v1698 = vunpack.c.l.b16 %v1537
    %v1699 = vunpack.c.l.b16 %v1538
    %v1700 = vunpack.c.l.b16 %v1539
    %v1701 = vunpack.c.l.b16 %v1540
    %v1702 = vunpack.c.l.b16 %v1541
    %v1703 = vunpack.c.l.b16 %v1542
    %v1704 = vunpack.c.l.b16 %v1543
    %v1705 = vunpack.c.l.b16 %v1544
    %v1706 = vunpack.c.l.b16 %v1545
    %v1707 = vunpack.c.l.b16 %v1546
    %v1708 = vunpack.c.l.b16 %v1547
    %v1709 = vunpack.c.l.b16 %v1548
    %v1710 = vunpack.c.l.b16 %v1549
    %v1711 = vunpack.c.l.b16 %v1550
    %v1712 = vunpack.c.l.b16 %v1551
    %v1713 = vunpack.c.l.b16 %v1552
    %v1714 = vunpack.c.l.b16 %v1553
    %v1715 = vunpack.c.l.b16 %v1554
    %v1716 = vunpack.c.l.b16 %v1555
    %v1717 = vunpack.c.l.b16 %v1556
    %v1718 = vunpack.c.l.b16 %v1557
    %v1719 = vunpack.c.l.b16 %v1558
    %v1720 = vunpack.c.l.b16 %v1559
    %v1721 = vunpack.c.l.b16 %v1560
    %v1722 = vunpack.c.l.b16 %v1561
    %v1723 = vunpack.c.l.b16 %v1562
    %v1724 = vunpack.c.l.b16 %v1563
    %v1725 = vunpack.c.l.b16 %v1564
    %v1726 = vunpack.c.l.b16 %v1565
    %v1727 = vunpack.c.l.b16 %v1566
    %v1728 = vunpack.c.l.b16 %v1567
    %v1729 = vunpack.c.l.b16 %v1568
    %v1730 = vunpack.c.l.b16 %v1569
    %v1731 = vunpack.c.l.b16 %v1570
    %v1732 = vunpack.c.l.b16 %v1571
    %v1733 = vunpack.c.l.b16 %v1572
    %v1734 = vunpack.c.l.b16 %v1573
    %v1735 = vunpack.c.l.b16 %v1574
    %v1736 = vunpack.c.l.b16 %v1575
    %v1737 = vunpack.c.l.b16 %v1576
    %v1738 = vpack.c.b16 %v1659, %v1658
    %v1739 = vpack.c.b16 %v1661, %v1660
    %v1740 = vpack.c.b16 %v1663, %v1662
    %v1741 = vpack.c.b16 %v1665, %v1664
    %v1742 = vpack.c.b16 %v1667, %v1666
    %v1743 = vpack.c.b16 %v1669, %v1668
    %v1744 = vpack.c.b16 %v1671, %v1670
    %v1745 = vpack.c.b16 %v1673, %v1672
    %v1746 = vpack.c.b16 %v1675, %v1674
    %v1747 = vpack.c.b16 %v1677, %v1676
    %v1748 = vpack.c.b16 %v1679, %v1678
    %v1749 = vpack.c.b16 %v1681, %v1680
    %v1750 = vpack.c.b16 %v1683, %v1682
    %v1751 = vpack.c.b16 %v1685, %v1684
    %v1752 = vpack.c.b16 %v1687, %v1686
    %v1753 = vpack.c.b16 %v1689, %v1688
    %v1754 = vpack.c.b16 %v1691, %v1690
    %v1755 = vpack.c.b16 %v1693, %v1692
    %v1756 = vpack.c.b16 %v1695, %v1694
    %v1757 = vpack.c.b16 %v1697, %v1696
    %v1758 = vpack.c.b16 %v1699, %v1698
    %v1759 = vpack.c.b16 %v1701, %v1700
    %v1760 = vpack.c.b16 %v1703, %v1702
    %v1761 = vpack.c.b16 %v1705, %v1704
    %v1762 = vpack.c.b16 %v1707, %v1706
    %v1763 = vpack.c.b16 %v1709, %v1708
    %v1764 = vpack.c.b16 %v1711, %v1710
    %v1765 = vpack.c.b16 %v1713, %v1712
    %v1766 = vpack.c.b16 %v1715, %v1714
    %v1767 = vpack.c.b16 %v1717, %v1716
    %v1768 = vpack.c.b16 %v1719, %v1718
    %v1769 = vpack.c.b16 %v1721, %v1720
    %v1770 = vpack.c.b16 %v1723, %v1722
    %v1771 = vpack.c.b16 %v1725, %v1724
    %v1772 = vpack.c.b16 %v1727, %v1726
    %v1773 = vpack.c.b16 %v1729, %v1728
    %v1774 = vpack.c.b16 %v1731, %v1730
    %v1775 = vpack.c.b16 %v1733, %v1732
    %v1776 = vpack.c.b16 %v1735, %v1734
    %v1777 = vpack.c.b16 %v1737, %v1736
    %1818 = vmatpush.bf16.msra.mxu0 %v1745
    %1819 = vmatpush.bf16.msra.mxu0 %v1744
    %1820 = vmatpush.bf16.msra.mxu0 %v1743
    %1821 = vmatpush.bf16.msra.mxu0 %v1742
    %1822 = vmatpush.bf16.msra.mxu0 %v1741
    %1823 = vmatpush.bf16.msra.mxu0 %v1740
    %1824 = vmatpush.bf16.msra.mxu0 %v1739
    %1825 = vmatpush.bf16.msra.mxu0 %v1738
    %1826 = vmatmul.bf16.gmra.mxu0 %v1492
    %v1827 = vpop.f32.mrf.mxu0
    %v1828 = vadd.f32 %v1577, %v1827
    %v1829 = vpop.f32.mrf.mxu0
    %1830 = vdwg.mxu0
    %1831 = vmatpush.bf16.msra.mxu0 %v1753
    %1832 = vmatpush.bf16.msra.mxu0 %v1752
    %1833 = vmatpush.bf16.msra.mxu0 %v1751
    %1834 = vmatpush.bf16.msra.mxu0 %v1750
    %1835 = vmatpush.bf16.msra.mxu0 %v1749
    %1836 = vmatpush.bf16.msra.mxu0 %v1748
    %1837 = vmatpush.bf16.msra.mxu0 %v1747
    %1838 = vmatpush.bf16.msra.mxu0 %v1746
    %1839 = vmatmul.bf16.gmra.mxu0 %v1493
    %v1840 = vpop.f32.mrf.mxu0
    %v1841 = vadd.f32 %v1828, %v1840
    %v1842 = vpop.f32.mrf.mxu0
    %1843 = vdwg.mxu0
    %1844 = vmatpush.bf16.msra.mxu0 %v1761
    %1845 = vmatpush.bf16.msra.mxu0 %v1760
    %1846 = vmatpush.bf16.msra.mxu0 %v1759
    %1847 = vmatpush.bf16.msra.mxu0 %v1758
    %1848 = vmatpush.bf16.msra.mxu0 %v1757
    %1849 = vmatpush.bf16.msra.mxu0 %v1756
    %1850 = vmatpush.bf16.msra.mxu0 %v1755
    %1851 = vmatpush.bf16.msra.mxu0 %v1754
    %1852 = vmatmul.bf16.gmra.mxu0 %v1494
    %v1853 = vpop.f32.mrf.mxu0
    %v1854 = vadd.f32 %v1841, %v1853
    %v1855 = vpop.f32.mrf.mxu0
    %1856 = vdwg.mxu0
    %1857 = vmatpush.bf16.msra.mxu0 %v1769
    %1858 = vmatpush.bf16.msra.mxu0 %v1768
    %1859 = vmatpush.bf16.msra.mxu0 %v1767
    %1860 = vmatpush.bf16.msra.mxu0 %v1766
    %1861 = vmatpush.bf16.msra.mxu0 %v1765
    %1862 = vmatpush.bf16.msra.mxu0 %v1764
    %1863 = vmatpush.bf16.msra.mxu0 %v1763
    %1864 = vmatpush.bf16.msra.mxu0 %v1762
    %1865 = vmatmul.bf16.gmra.mxu0 %v1495
    %v1866 = vpop.f32.mrf.mxu0
    %v1867 = vadd.f32 %v1854, %v1866
    %v1868 = vpop.f32.mrf.mxu0
    %1869 = vdwg.mxu0
    %1870 = vmatpush.bf16.msra.mxu0 %v1777
    %1871 = vmatpush.bf16.msra.mxu0 %v1776
    %1872 = vmatpush.bf16.msra.mxu0 %v1775
    %1873 = vmatpush.bf16.msra.mxu0 %v1774
    %1874 = vmatpush.bf16.msra.mxu0 %v1773
    %1875 = vmatpush.bf16.msra.mxu0 %v1772
    %1876 = vmatpush.bf16.msra.mxu0 %v1771
    %1877 = vmatpush.bf16.msra.mxu0 %v1770
    %1878 = vmatmul.bf16.gmra.mxu0 %v1496
    %v1879 = vpop.f32.mrf.mxu0
    %v1880 = vadd.f32 %v1867, %v1879
    %v1881 = vpop.f32.mrf.mxu0
    %1882 = vdwg.mxu0
    %v1883 = vmul.f32 %v1880, 0.5
    %v1884 = vtanh.pop %v1883
    %v1885 = vmul.f32 %v1884, 0.5
    %v1886 = vadd.f32 %v1885, 0.5
    %v1887 = vpack.c.bf16 %v1886, %v1886
    %v1888 = vld [vmem:[%s8] sm:$0xf]
    %v1889 = vld [vmem:[%s8 + $0x4] sm:$0xf]
    %v1890 = vld [vmem:[%s8 + $0x8] sm:$0xf]
    %v1891 = vld [vmem:[%s8 + $0xc] sm:$0xf]
    %v1892 = vld [vmem:[%s8 + $0x10] sm:$0xf]
    %v1893 = vld [vmem:[%s8 + $0x14] sm:$0xf]
    %v1894 = vld [vmem:[%s8 + $0x18] sm:$0xf]
    %v1895 = vld [vmem:[%s8 + $0x1c] sm:$0xf]
    %v1896 = vld [vmem:[%s8 + $0x20] sm:$0xf]
    %v1897 = vld [vmem:[%s8 + $0x24] sm:$0xf]
    %v1898 = vld [vmem:[%s8 + $0x28] sm:$0xf]
    %v1899 = vld [vmem:[%s8 + $0x2c] sm:$0xf]
    %v1900 = vld [vmem:[%s8 + $0x30] sm:$0xf]
    %v1901 = vld [vmem:[%s8 + $0x34] sm:$0xf]
    %v1902 = vld [vmem:[%s8 + $0x38] sm:$0xf]
    %v1903 = vperm.slane %v40, 3
    %v1919 = vunpack.c.l.b16 %v1888
    %v1920 = vunpack.c.l.b16 %v1889
    %v1921 = vunpack.c.l.b16 %v1890
    %v1922 = vunpack.c.l.b16 %v1891
    %v1923 = vunpack.c.l.b16 %v1892
    %v1924 = vunpack.c.l.b16 %v1893
    %v1925 = vunpack.c.l.b16 %v1894
    %v1926 = vunpack.c.l.b16 %v1895
    %v1927 = vunpack.c.l.b16 %v1896
    %v1928 = vunpack.c.l.b16 %v1897
    %v1929 = vunpack.c.l.b16 %v1898
    %v1930 = vunpack.c.l.b16 %v1899
    %v1931 = vunpack.c.l.b16 %v1900
    %v1932 = vunpack.c.l.b16 %v1901
    %v1933 = vunpack.c.l.b16 %v1902
    %v1934 = vpack.c.b16 %v1920, %v1919
    %v1935 = vpack.c.b16 %v1922, %v1921
    %v1936 = vpack.c.b16 %v1924, %v1923
    %v1937 = vpack.c.b16 %v1926, %v1925
    %v1938 = vpack.c.b16 %v1928, %v1927
    %v1939 = vpack.c.b16 %v1930, %v1929
    %v1940 = vpack.c.b16 %v1932, %v1931
    %v1941 = vpack.c.b16 %v1933, %v1933
    %vm1949 = vcmask 982016
    %v1951 = vsel %vm1949, %v1887, 0
    %v1954 = vsel %vm414, %v1941, 0
    %1956 = vmatpush.bf16.msra.mxu0 %v1954
    %1957 = vmatpush.bf16.msra.mxu0 %v1940
    %1958 = vmatpush.bf16.msra.mxu0 %v1939
    %1959 = vmatpush.bf16.msra.mxu0 %v1938
    %1960 = vmatpush.bf16.msra.mxu0 %v1937
    %1961 = vmatpush.bf16.msra.mxu0 %v1936
    %1962 = vmatpush.bf16.msra.mxu0 %v1935
    %1963 = vmatpush.bf16.msra.mxu0 %v1934
    %1964 = vmatmul.bf16.gmra.mxu0 %v1951
    %v1965 = vpop.f32.mrf.mxu0
    %v1966 = vadd.f32 %v1903, %v1965
    %v1967 = vpop.f32.mrf.mxu0
    %1968 = vdwg.mxu0
    %v1969 = vmul.f32 %v1966, 0.5
    %v1970 = vtanh.pop %v1969
    %v1971 = vmul.f32 %v1970, 0.5
    %v1972 = vadd.f32 %v1971, 0.5
    %v1973 = vpack.c.bf16 %v1972, %v1972
    %v1974 = vld [vmem:[%s9] sm:$0xf]
    %v1975 = vld [vmem:[%s9 + $0x4] sm:$0xf]
    %v1976 = vld [vmem:[%s9 + $0x8] sm:$0xf]
    %v1977 = vld [vmem:[%s9 + $0xc] sm:$0xf]
    %v1978 = vld [vmem:[%s9 + $0x10] sm:$0xf]
    %v1979 = vld [vmem:[%s9 + $0x14] sm:$0xf]
    %v1980 = vld [vmem:[%s9 + $0x18] sm:$0xf]
    %v1981 = vld [vmem:[%s9 + $0x1c] sm:$0xf]
    %v1982 = vld [vmem:[%s9 + $0x20] sm:$0xf]
    %v1983 = vld [vmem:[%s9 + $0x24] sm:$0xf]
    %v1984 = vld [vmem:[%s9 + $0x28] sm:$0x3]
    %v1985 = vperm.slane %v40, 4
    %v1997 = vunpack.c.l.b16 %v1974
    %v1998 = vunpack.c.l.b16 %v1975
    %v1999 = vunpack.c.l.b16 %v1976
    %v2000 = vunpack.c.l.b16 %v1977
    %v2001 = vunpack.c.l.b16 %v1978
    %v2002 = vunpack.c.l.b16 %v1979
    %v2003 = vunpack.c.l.b16 %v1980
    %v2004 = vunpack.c.l.b16 %v1981
    %v2005 = vunpack.c.l.b16 %v1982
    %v2006 = vunpack.c.l.b16 %v1983
    %v2007 = vunpack.c.l.b16 %v1984
    %v2008 = vpack.c.b16 %v1998, %v1997
    %v2009 = vpack.c.b16 %v2000, %v1999
    %v2010 = vpack.c.b16 %v2002, %v2001
    %v2011 = vpack.c.b16 %v2004, %v2003
    %v2012 = vpack.c.b16 %v2006, %v2005
    %v2013 = vpack.c.b16 %v2007, %v2007
    %vm2019 = vcmask 687104
    %v2021 = vsel %vm2019, %v1973, 0
    %v2024 = vsel %vm616, %v2013, 0
    %2026 = vmatpush.bf16.msra.mxu0 0
    %2027 = vmatpush.bf16.msra.mxu0 0
    %2028 = vmatpush.bf16.msra.mxu0 %v2024
    %2029 = vmatpush.bf16.msra.mxu0 %v2012
    %2030 = vmatpush.bf16.msra.mxu0 %v2011
    %2031 = vmatpush.bf16.msra.mxu0 %v2010
    %2032 = vmatpush.bf16.msra.mxu0 %v2009
    %2033 = vmatpush.bf16.msra.mxu0 %v2008
    %2034 = vmatmul.bf16.gmra.mxu0 %v2021
    %v2035 = vpop.f32.mrf.mxu0
    %v2036 = vadd.f32 %v1985, %v2035
    %v2037 = vpop.f32.mrf.mxu0
    %2038 = vdwg.mxu0
    %vm2039 = vcmask 74752
    %v2040 = vsel %vm2039, %v2036, -inf
    %2041 = vmax.xlane.f32.xlu0 %v2040
    %v2042 = vpop.xlane.xlu0 %2041
    %v2043 = vsub.f32 %v2036, %v2042
    %v2044 = vmul.f32 %v2043, 1.442695
    %v2045 = vpow.pop %v2044
    %v2046 = vsel %vm2039, %v2045, 0.0
    %2047 = vadd.xlane.f32.xlu0 %v2046
    %v2048 = vpop.xlane.xlu0 %2047
    %v2049 = vrcp.pop %v2048
    %v2050 = vmul.f32 %v2048, %v2049
    %v2051 = vsub.f32 1.0, %v2050
    %v2052 = vmul.f32 %v2049, %v2051
    %v2053 = vadd.f32 %v2049, %v2052
    %vm2054 = vweird.f32 %v2048
    %vm2055 = vweird.f32 %v2049
    %vm2056 = vmor %vm2054, %vm2055
    %v2057 = vsel %vm2056, %v2049, %v2053
    %v2058 = vand.u32 2147483647, %v2048
    %vm2059 = vcmp.eq.f32.partialorder %v2058, 8.507059e+37
    %v2060 = vand.u32 %v2048, 2147483648
    %v2061 = vor.u32 1.1754944e-38, %v2060
    %v2062 = vsel %vm2059, %v2061, %v2057
    %v2063 = vmul.f32 %v2045, %v2062
    %2064 = vst.msk [vmem:[#allocation2] sm:$0x3] %vm2039, %v2063
    // Predicated region
    $region46: #{lenet_forward.1} parent=1 // pred_check
      _
    $region47: #{lenet_forward.1} parent=1 // pred_check_branch
      %2066 = sbr.rel (0) target = $region49
    $region48: #{lenet_forward.1} parent=1 // pred_region
      %2068 = vsyncadd [#allocation3], 0
      %s2070 = sshll.u32 [#allocation2], 4
      %s2071 = int_to_ptr.vmem [resolvable:$true] %s2070
      %s2072 = sshll.u32 %s11, 4
      %s2073 = int_to_ptr.hbm [resolvable:$true] %s2072
      %2075 = dma.vmem_to_hbm [thread:$0]  %s2071, 32, %s2073, [#allocation3]
    $region49: #{lenet_forward.1} parent=1 // pred_fallthru
      _
    // Predicated region
    $region50: #{lenet_forward.1} parent=1 // pred_check
      _
    $region51: #{lenet_forward.1} parent=1 // pred_check_branch
      %2077 = sbr.rel (0) target = $region53
    $region52: #{lenet_forward.1} parent=1 // pred_region
      %2079 = dma.done [#allocation3], 32
    $region53: #{lenet_forward.1} parent=1 // pred_fallthru
      _
    %2080 = vsyncpa [#allocation3], 1

</llo_original>
